<compile_context>
chip_gen: v5e
topology: v5e:2x2
jax: 0.10.0
libtpu: 0.0.40
codegen_flags: <defaults>
</compile_context>

<pallas_src>
import math

import jax
import jax.numpy as jnp
from jax.experimental import pallas as pl
from jax.experimental.pallas import tpu as pltpu

SUBLANE = 8


# --------------------------- fused LSTM + dense kernel ------------------------
def _make_fused_kernel(T, Bp, H, O, num_layers):
    L = num_layers

    def kernel(*refs):
        # inputs: x, (w_ih_t, w_hh_t, b_row) * L, h0, c0, dense_w_t, dense_b_row
        x_ref = refs[0]
        layer_refs = refs[1:1 + 3 * L]
        h0_ref, c0_ref, dw_ref, db_ref = refs[1 + 3 * L:5 + 3 * L]
        # outputs: per-timestep dense out, h_T per layer, c_T per layer
        out_ref, hN_ref, cN_ref = refs[5 + 3 * L:8 + 3 * L]
        # scratch: hidden-state sequence of the current layer
        hseq = refs[8 + 3 * L]                               # VMEM (T, Bp, H) f32

        cur = x_ref[...].astype(jnp.float32)                 # (T, Bp, in_sz)
        for layer in range(L):
            wih = layer_refs[3 * layer][...]                 # (in_sz, 4H)
            whh = layer_refs[3 * layer + 1][...]             # (H, 4H)
            b = layer_refs[3 * layer + 2][...]               # (1, 4H)
            in_sz = cur.shape[-1]

            # Hoisted input projection: one batched matmul over all timesteps.
            gx = (jnp.dot(cur.reshape(T * Bp, in_sz), wih,
                          preferred_element_type=jnp.float32)
                  + b).reshape(T, Bp, 4 * H)                 # (T, Bp, 4H)

            h = h0_ref[layer].astype(jnp.float32)            # (Bp, H)
            c = c0_ref[layer].astype(jnp.float32)            # (Bp, H)

            # Fully unrolled recurrence; static slice indices everywhere.
            for t in range(T):
                gates = gx[t] + jnp.dot(h, whh,
                                        preferred_element_type=jnp.float32)
                sig = jax.nn.sigmoid(gates)                  # one full-width EUP pass
                i_g = sig[:, 0:H]
                f_g = sig[:, H:2 * H]
                o_g = sig[:, 3 * H:4 * H]
                g_g = jnp.tanh(gates[:, 2 * H:3 * H])
                c = f_g * c + i_g * g_g
                h = o_g * jnp.tanh(c)
                hseq[t] = h

            # final states written exactly once per layer
            hN_ref[layer] = h.astype(hN_ref.dtype)
            cN_ref[layer] = c.astype(cN_ref.dtype)
            cur = hseq[...]                                  # (T, Bp, H)

        # Fused dense projection over the whole sequence.
        out = (jnp.dot(cur.reshape(T * Bp, H), dw_ref[...],
                       preferred_element_type=jnp.float32)
               + db_ref[...])                                # (T*Bp, O)
        out_ref[...] = out.astype(out_ref.dtype)

    return kernel


# ----------------------------- Module forward ---------------------------------
def init_params(key, input_size, hidden_size, num_layers, output_size):
    """Deterministic init matching torch's shapes: U(-1/sqrt(H), 1/sqrt(H))."""
    k = 1.0 / math.sqrt(hidden_size)
    keys = jax.random.split(key, num_layers * 4 + 2)
    idx = 0
    lstm_params = []
    for layer in range(num_layers):
        in_sz = input_size if layer == 0 else hidden_size
        w_ih = jax.random.uniform(keys[idx], (4 * hidden_size, in_sz),
                                  jnp.float32, -k, k); idx += 1
        w_hh = jax.random.uniform(keys[idx], (4 * hidden_size, hidden_size),
                                  jnp.float32, -k, k); idx += 1
        b_ih = jax.random.uniform(keys[idx], (4 * hidden_size,),
                                  jnp.float32, -k, k); idx += 1
        b_hh = jax.random.uniform(keys[idx], (4 * hidden_size,),
                                  jnp.float32, -k, k); idx += 1
        lstm_params.append((w_ih, w_hh, b_ih, b_hh))
    dense_w = jax.random.uniform(keys[idx], (output_size, hidden_size),
                                 jnp.float32, -k, k); idx += 1
    dense_b = jax.random.uniform(keys[idx], (output_size,), jnp.float32, -k, k)
    return lstm_params, dense_w, dense_b


def mylstm_forward(x, lstm_params, dense_w, dense_b, h_state=None):
    """x: (B, T, input_size), batch-first like the torch module.
    Returns (Out.view(-1), (h_n, c_n)) with h_n/c_n of shape (L, B, H)."""
    B, T, _ = x.shape
    O, H = dense_w.shape
    L = len(lstm_params)
    Bp = max(SUBLANE, ((B + SUBLANE - 1) // SUBLANE) * SUBLANE)
    pad_b = Bp - B

    if h_state is None:
        h0 = jnp.zeros((L, B, H), x.dtype)
        c0 = jnp.zeros((L, B, H), x.dtype)
    else:
        h0, c0 = h_state

    # time-major + sublane-pad the batch
    x_p = jnp.pad(jnp.transpose(x, (1, 0, 2)), ((0, 0), (0, pad_b), (0, 0)))
    h0_p = jnp.pad(h0, ((0, 0), (0, pad_b), (0, 0)))
    c0_p = jnp.pad(c0, ((0, 0), (0, pad_b), (0, 0)))

    flat_weights = []
    for (w_ih, w_hh, b_ih, b_hh) in lstm_params:
        flat_weights += [w_ih.T, w_hh.T, (b_ih + b_hh).reshape(1, -1)]

    kernel = _make_fused_kernel(T, Bp, H, O, L)
    out_shapes = (
        jax.ShapeDtypeStruct((T * Bp, O), x.dtype),   # per-timestep dense output
        jax.ShapeDtypeStruct((L, Bp, H), x.dtype),    # h_T per layer
        jax.ShapeDtypeStruct((L, Bp, H), x.dtype),    # c_T per layer
    )
    out_p, hN_p, cN_p = pl.pallas_call(
        kernel,
        out_shape=out_shapes,
        scratch_shapes=[pltpu.VMEM((T, Bp, H), jnp.float32)],
    )(x_p, *flat_weights, h0_p, c0_p, dense_w.T, dense_b.reshape(1, -1))

    out_tm = out_p.reshape(T, Bp, O)[:, :B, :]        # (T, B, O)
    out = jnp.transpose(out_tm, (1, 0, 2)).reshape(-1)  # torch: (B,T,O).view(-1)
    h_n = hN_p[:, :B, :]
    c_n = cN_p[:, :B, :]
    return out, (h_n, c_n)


# ------------------------------ pure-JAX reference ----------------------------
def ref_forward(x, lstm_params, dense_w, dense_b):
    B, T, _ = x.shape
    H = dense_w.shape[1]
    with jax.default_matmul_precision("highest"):
        cur = x
        hs, cs = [], []
        for (w_ih, w_hh, b_ih, b_hh) in lstm_params:
            h = jnp.zeros((B, H), jnp.float32)
            c = jnp.zeros((B, H), jnp.float32)
            outs = []
            for t in range(T):
                g = cur[:, t, :] @ w_ih.T + h @ w_hh.T + b_ih + b_hh
                i = jax.nn.sigmoid(g[:, :H])
                f = jax.nn.sigmoid(g[:, H:2 * H])
                gg = jnp.tanh(g[:, 2 * H:3 * H])
                o = jax.nn.sigmoid(g[:, 3 * H:])
                c = f * c + i * gg
                h = o * jnp.tanh(c)
                outs.append(h)
            cur = jnp.stack(outs, axis=1)
            hs.append(h)
            cs.append(c)
        out = cur @ dense_w.T + dense_b
    return out.reshape(-1), (jnp.stack(hs), jnp.stack(cs))


if __name__ == "__main__":
    input_size, hidden_size, num_layers, output_size = 4, 32, 2, 1
    batch, seq = 2, 8

    key = jax.random.PRNGKey(0)
    kx, kp = jax.random.split(key)
    x = jax.random.normal(kx, (batch, seq, input_size), jnp.float32)
    lstm_params, dense_w, dense_b = init_params(
        kp, input_size, hidden_size, num_layers, output_size)

    out, (h_n, c_n) = mylstm_forward(x, lstm_params, dense_w, dense_b)
    jax.block_until_ready((out, h_n, c_n))

    ref_out, (ref_h, ref_c) = ref_forward(x, lstm_params, dense_w, dense_b)
    assert out.shape == (batch * seq * output_size,)
    assert h_n.shape == (num_layers, batch, hidden_size)
    assert c_n.shape == (num_layers, batch, hidden_size)
    assert jnp.allclose(out, ref_out, atol=1e-3, rtol=1e-3)
    assert jnp.allclose(h_n, ref_h, atol=1e-3, rtol=1e-3)
    assert jnp.allclose(c_n, ref_c, atol=1e-3, rtol=1e-3)

    print("KERNEL_OK")
</pallas_src>

<mosaic_0001>
module attributes {stable_mosaic.version = 11 : i64} {
  func.func @kernel(%arg0: memref<8x8x4xf32, #tpu.memory_space<vmem>>, %arg1: memref<4x128xf32, #tpu.memory_space<vmem>>, %arg2: memref<32x128xf32, #tpu.memory_space<vmem>>, %arg3: memref<1x128xf32, #tpu.memory_space<vmem>>, %arg4: memref<32x128xf32, #tpu.memory_space<vmem>>, %arg5: memref<32x128xf32, #tpu.memory_space<vmem>>, %arg6: memref<1x128xf32, #tpu.memory_space<vmem>>, %arg7: memref<2x8x32xf32, #tpu.memory_space<vmem>>, %arg8: memref<2x8x32xf32, #tpu.memory_space<vmem>>, %arg9: memref<32x1xf32, #tpu.memory_space<vmem>>, %arg10: memref<1x1xf32, #tpu.memory_space<vmem>>, %arg11: memref<64x1xf32, #tpu.memory_space<vmem>>, %arg12: memref<2x8x32xf32, #tpu.memory_space<vmem>>, %arg13: memref<2x8x32xf32, #tpu.memory_space<vmem>>, %arg14: memref<8x8x32xf32, #tpu.memory_space<vmem>>) attributes {dimension_semantics = [], scalar_prefetch = 0 : i64, scratch_operands = 1 : i64, tpu.core_type = #tpu.core_type<tc>} {
    %c0 = arith.constant 0 : index
    %c0_0 = arith.constant 0 : index
    %c0_1 = arith.constant 0 : index
    %0 = vector.load %arg0[%c0, %c0_0, %c0_1] : memref<8x8x4xf32, #tpu.memory_space<vmem>>, vector<8x8x4xf32>
    %c0_2 = arith.constant 0 : index
    %c0_3 = arith.constant 0 : index
    %1 = vector.load %arg1[%c0_2, %c0_3] : memref<4x128xf32, #tpu.memory_space<vmem>>, vector<4x128xf32>
    %c0_4 = arith.constant 0 : index
    %c0_5 = arith.constant 0 : index
    %2 = vector.load %arg2[%c0_4, %c0_5] : memref<32x128xf32, #tpu.memory_space<vmem>>, vector<32x128xf32>
    %c0_6 = arith.constant 0 : index
    %c0_7 = arith.constant 0 : index
    %3 = vector.load %arg3[%c0_6, %c0_7] : memref<1x128xf32, #tpu.memory_space<vmem>>, vector<1x128xf32>
    %4 = vector.shape_cast %0 : vector<8x8x4xf32> to vector<64x4xf32>
    %cst = arith.constant dense<0.000000e+00> : vector<64x128xf32>
    %5 = tpu.matmul %4, %1, %cst {dimension_numbers = #tpu.dot_dimension_numbers<[1], [0], [0], [1], [0, 0, 1, 1], [], []>} : vector<64x4xf32>, vector<4x128xf32>, vector<64x128xf32> -> vector<64x128xf32>
    %6 = vector.broadcast %3 : vector<1x128xf32> to vector<64x128xf32>
    %7 = arith.addf %5, %6 : vector<64x128xf32>
    %8 = vector.shape_cast %7 : vector<64x128xf32> to vector<8x8x128xf32>
    %c0_8 = arith.constant 0 : index
    %c0_9 = arith.constant 0 : index
    %c0_10 = arith.constant 0 : index
    %9 = vector.load %arg7[%c0_8, %c0_9, %c0_10] : memref<2x8x32xf32, #tpu.memory_space<vmem>>, vector<1x8x32xf32>
    %10 = vector.shape_cast %9 : vector<1x8x32xf32> to vector<8x32xf32>
    %c0_11 = arith.constant 0 : index
    %c0_12 = arith.constant 0 : index
    %c0_13 = arith.constant 0 : index
    %11 = vector.load %arg8[%c0_11, %c0_12, %c0_13] : memref<2x8x32xf32, #tpu.memory_space<vmem>>, vector<1x8x32xf32>
    %12 = vector.shape_cast %11 : vector<1x8x32xf32> to vector<8x32xf32>
    %13 = vector.extract_strided_slice %8 {offsets = [0, 0, 0], sizes = [1, 8, 128], strides = [1, 1, 1]} : vector<8x8x128xf32> to vector<1x8x128xf32>
    %14 = vector.shape_cast %13 : vector<1x8x128xf32> to vector<8x128xf32>
    %cst_14 = arith.constant dense<0.000000e+00> : vector<8x128xf32>
    %15 = tpu.matmul %10, %2, %cst_14 {dimension_numbers = #tpu.dot_dimension_numbers<[1], [0], [0], [1], [0, 0, 1, 1], [], []>} : vector<8x32xf32>, vector<32x128xf32>, vector<8x128xf32> -> vector<8x128xf32>
    %16 = arith.addf %14, %15 : vector<8x128xf32>
    %17 = arith.negf %16 : vector<8x128xf32>
    %18 = math.exp %17 : vector<8x128xf32>
    %cst_15 = arith.constant 1.000000e+00 : f32
    %19 = vector.broadcast %cst_15 : f32 to vector<8x128xf32>
    %20 = arith.addf %19, %18 : vector<8x128xf32>
    %21 = arith.divf %19, %20 : vector<8x128xf32>
    %22 = vector.extract_strided_slice %21 {offsets = [0, 0], sizes = [8, 32], strides = [1, 1]} : vector<8x128xf32> to vector<8x32xf32>
    %23 = vector.extract_strided_slice %21 {offsets = [0, 32], sizes = [8, 32], strides = [1, 1]} : vector<8x128xf32> to vector<8x32xf32>
    %24 = vector.extract_strided_slice %21 {offsets = [0, 96], sizes = [8, 32], strides = [1, 1]} : vector<8x128xf32> to vector<8x32xf32>
    %25 = vector.extract_strided_slice %16 {offsets = [0, 64], sizes = [8, 32], strides = [1, 1]} : vector<8x128xf32> to vector<8x32xf32>
    %26 = math.tanh %25 : vector<8x32xf32>
    %27 = arith.mulf %23, %12 : vector<8x32xf32>
    %28 = arith.mulf %22, %26 : vector<8x32xf32>
    %29 = arith.addf %27, %28 : vector<8x32xf32>
    %30 = math.tanh %29 : vector<8x32xf32>
    %31 = arith.mulf %24, %30 : vector<8x32xf32>
    %c0_16 = arith.constant 0 : index
    %c0_17 = arith.constant 0 : index
    %c0_18 = arith.constant 0 : index
    %32 = vector.load %arg14[%c0_16, %c0_17, %c0_18] : memref<8x8x32xf32, #tpu.memory_space<vmem>>, vector<1x8x32xf32>
    %33 = vector.shape_cast %32 : vector<1x8x32xf32> to vector<8x32xf32>
    %34 = vector.shape_cast %31 : vector<8x32xf32> to vector<1x8x32xf32>
    tpu.vector_store %arg14[%c0_16, %c0_17, %c0_18], %34 {strides = array<i32>} : memref<8x8x32xf32, #tpu.memory_space<vmem>>, vector<1x8x32xf32>,
    %35 = vector.extract_strided_slice %8 {offsets = [1, 0, 0], sizes = [1, 8, 128], strides = [1, 1, 1]} : vector<8x8x128xf32> to vector<1x8x128xf32>
    %36 = vector.shape_cast %35 : vector<1x8x128xf32> to vector<8x128xf32>
    %cst_19 = arith.constant dense<0.000000e+00> : vector<8x128xf32>
    %37 = tpu.matmul %31, %2, %cst_19 {dimension_numbers = #tpu.dot_dimension_numbers<[1], [0], [0], [1], [0, 0, 1, 1], [], []>} : vector<8x32xf32>, vector<32x128xf32>, vector<8x128xf32> -> vector<8x128xf32>
    %38 = arith.addf %36, %37 : vector<8x128xf32>
    %39 = arith.negf %38 : vector<8x128xf32>
    %40 = math.exp %39 : vector<8x128xf32>
    %cst_20 = arith.constant 1.000000e+00 : f32
    %41 = vector.broadcast %cst_20 : f32 to vector<8x128xf32>
    %42 = arith.addf %41, %40 : vector<8x128xf32>
    %43 = arith.divf %41, %42 : vector<8x128xf32>
    %44 = vector.extract_strided_slice %43 {offsets = [0, 0], sizes = [8, 32], strides = [1, 1]} : vector<8x128xf32> to vector<8x32xf32>
    %45 = vector.extract_strided_slice %43 {offsets = [0, 32], sizes = [8, 32], strides = [1, 1]} : vector<8x128xf32> to vector<8x32xf32>
    %46 = vector.extract_strided_slice %43 {offsets = [0, 96], sizes = [8, 32], strides = [1, 1]} : vector<8x128xf32> to vector<8x32xf32>
    %47 = vector.extract_strided_slice %38 {offsets = [0, 64], sizes = [8, 32], strides = [1, 1]} : vector<8x128xf32> to vector<8x32xf32>
    %48 = math.tanh %47 : vector<8x32xf32>
    %49 = arith.mulf %45, %29 : vector<8x32xf32>
    %50 = arith.mulf %44, %48 : vector<8x32xf32>
    %51 = arith.addf %49, %50 : vector<8x32xf32>
    %52 = math.tanh %51 : vector<8x32xf32>
    %53 = arith.mulf %46, %52 : vector<8x32xf32>
    %c1 = arith.constant 1 : index
    %c0_21 = arith.constant 0 : index
    %c0_22 = arith.constant 0 : index
    %54 = vector.load %arg14[%c1, %c0_21, %c0_22] : memref<8x8x32xf32, #tpu.memory_space<vmem>>, vector<1x8x32xf32>
    %55 = vector.shape_cast %54 : vector<1x8x32xf32> to vector<8x32xf32>
    %56 = vector.shape_cast %53 : vector<8x32xf32> to vector<1x8x32xf32>
    tpu.vector_store %arg14[%c1, %c0_21, %c0_22], %56 {strides = array<i32>} : memref<8x8x32xf32, #tpu.memory_space<vmem>>, vector<1x8x32xf32>,
    %57 = vector.extract_strided_slice %8 {offsets = [2, 0, 0], sizes = [1, 8, 128], strides = [1, 1, 1]} : vector<8x8x128xf32> to vector<1x8x128xf32>
    %58 = vector.shape_cast %57 : vector<1x8x128xf32> to vector<8x128xf32>
    %cst_23 = arith.constant dense<0.000000e+00> : vector<8x128xf32>
    %59 = tpu.matmul %53, %2, %cst_23 {dimension_numbers = #tpu.dot_dimension_numbers<[1], [0], [0], [1], [0, 0, 1, 1], [], []>} : vector<8x32xf32>, vector<32x128xf32>, vector<8x128xf32> -> vector<8x128xf32>
    %60 = arith.addf %58, %59 : vector<8x128xf32>
    %61 = arith.negf %60 : vector<8x128xf32>
    %62 = math.exp %61 : vector<8x128xf32>
    %cst_24 = arith.constant 1.000000e+00 : f32
    %63 = vector.broadcast %cst_24 : f32 to vector<8x128xf32>
    %64 = arith.addf %63, %62 : vector<8x128xf32>
    %65 = arith.divf %63, %64 : vector<8x128xf32>
    %66 = vector.extract_strided_slice %65 {offsets = [0, 0], sizes = [8, 32], strides = [1, 1]} : vector<8x128xf32> to vector<8x32xf32>
    %67 = vector.extract_strided_slice %65 {offsets = [0, 32], sizes = [8, 32], strides = [1, 1]} : vector<8x128xf32> to vector<8x32xf32>
    %68 = vector.extract_strided_slice %65 {offsets = [0, 96], sizes = [8, 32], strides = [1, 1]} : vector<8x128xf32> to vector<8x32xf32>
    %69 = vector.extract_strided_slice %60 {offsets = [0, 64], sizes = [8, 32], strides = [1, 1]} : vector<8x128xf32> to vector<8x32xf32>
    %70 = math.tanh %69 : vector<8x32xf32>
    %71 = arith.mulf %67, %51 : vector<8x32xf32>
    %72 = arith.mulf %66, %70 : vector<8x32xf32>
    %73 = arith.addf %71, %72 : vector<8x32xf32>
    %74 = math.tanh %73 : vector<8x32xf32>
    %75 = arith.mulf %68, %74 : vector<8x32xf32>
    %c2 = arith.constant 2 : index
    %c0_25 = arith.constant 0 : index
    %c0_26 = arith.constant 0 : index
    %76 = vector.load %arg14[%c2, %c0_25, %c0_26] : memref<8x8x32xf32, #tpu.memory_space<vmem>>, vector<1x8x32xf32>
    %77 = vector.shape_cast %76 : vector<1x8x32xf32> to vector<8x32xf32>
    %78 = vector.shape_cast %75 : vector<8x32xf32> to vector<1x8x32xf32>
    tpu.vector_store %arg14[%c2, %c0_25, %c0_26], %78 {strides = array<i32>} : memref<8x8x32xf32, #tpu.memory_space<vmem>>, vector<1x8x32xf32>,
    %79 = vector.extract_strided_slice %8 {offsets = [3, 0, 0], sizes = [1, 8, 128], strides = [1, 1, 1]} : vector<8x8x128xf32> to vector<1x8x128xf32>
    %80 = vector.shape_cast %79 : vector<1x8x128xf32> to vector<8x128xf32>
    %cst_27 = arith.constant dense<0.000000e+00> : vector<8x128xf32>
    %81 = tpu.matmul %75, %2, %cst_27 {dimension_numbers = #tpu.dot_dimension_numbers<[1], [0], [0], [1], [0, 0, 1, 1], [], []>} : vector<8x32xf32>, vector<32x128xf32>, vector<8x128xf32> -> vector<8x128xf32>
    %82 = arith.addf %80, %81 : vector<8x128xf32>
    %83 = arith.negf %82 : vector<8x128xf32>
    %84 = math.exp %83 : vector<8x128xf32>
    %cst_28 = arith.constant 1.000000e+00 : f32
    %85 = vector.broadcast %cst_28 : f32 to vector<8x128xf32>
    %86 = arith.addf %85, %84 : vector<8x128xf32>
    %87 = arith.divf %85, %86 : vector<8x128xf32>
    %88 = vector.extract_strided_slice %87 {offsets = [0, 0], sizes = [8, 32], strides = [1, 1]} : vector<8x128xf32> to vector<8x32xf32>
    %89 = vector.extract_strided_slice %87 {offsets = [0, 32], sizes = [8, 32], strides = [1, 1]} : vector<8x128xf32> to vector<8x32xf32>
    %90 = vector.extract_strided_slice %87 {offsets = [0, 96], sizes = [8, 32], strides = [1, 1]} : vector<8x128xf32> to vector<8x32xf32>
    %91 = vector.extract_strided_slice %82 {offsets = [0, 64], sizes = [8, 32], strides = [1, 1]} : vector<8x128xf32> to vector<8x32xf32>
    %92 = math.tanh %91 : vector<8x32xf32>
    %93 = arith.mulf %89, %73 : vector<8x32xf32>
    %94 = arith.mulf %88, %92 : vector<8x32xf32>
    %95 = arith.addf %93, %94 : vector<8x32xf32>
    %96 = math.tanh %95 : vector<8x32xf32>
    %97 = arith.mulf %90, %96 : vector<8x32xf32>
    %c3 = arith.constant 3 : index
    %c0_29 = arith.constant 0 : index
    %c0_30 = arith.constant 0 : index
    %98 = vector.load %arg14[%c3, %c0_29, %c0_30] : memref<8x8x32xf32, #tpu.memory_space<vmem>>, vector<1x8x32xf32>
    %99 = vector.shape_cast %98 : vector<1x8x32xf32> to vector<8x32xf32>
    %100 = vector.shape_cast %97 : vector<8x32xf32> to vector<1x8x32xf32>
    tpu.vector_store %arg14[%c3, %c0_29, %c0_30], %100 {strides = array<i32>} : memref<8x8x32xf32, #tpu.memory_space<vmem>>, vector<1x8x32xf32>,
    %101 = vector.extract_strided_slice %8 {offsets = [4, 0, 0], sizes = [1, 8, 128], strides = [1, 1, 1]} : vector<8x8x128xf32> to vector<1x8x128xf32>
    %102 = vector.shape_cast %101 : vector<1x8x128xf32> to vector<8x128xf32>
    %cst_31 = arith.constant dense<0.000000e+00> : vector<8x128xf32>
    %103 = tpu.matmul %97, %2, %cst_31 {dimension_numbers = #tpu.dot_dimension_numbers<[1], [0], [0], [1], [0, 0, 1, 1], [], []>} : vector<8x32xf32>, vector<32x128xf32>, vector<8x128xf32> -> vector<8x128xf32>
    %104 = arith.addf %102, %103 : vector<8x128xf32>
    %105 = arith.negf %104 : vector<8x128xf32>
    %106 = math.exp %105 : vector<8x128xf32>
    %cst_32 = arith.constant 1.000000e+00 : f32
    %107 = vector.broadcast %cst_32 : f32 to vector<8x128xf32>
    %108 = arith.addf %107, %106 : vector<8x128xf32>
    %109 = arith.divf %107, %108 : vector<8x128xf32>
    %110 = vector.extract_strided_slice %109 {offsets = [0, 0], sizes = [8, 32], strides = [1, 1]} : vector<8x128xf32> to vector<8x32xf32>
    %111 = vector.extract_strided_slice %109 {offsets = [0, 32], sizes = [8, 32], strides = [1, 1]} : vector<8x128xf32> to vector<8x32xf32>
    %112 = vector.extract_strided_slice %109 {offsets = [0, 96], sizes = [8, 32], strides = [1, 1]} : vector<8x128xf32> to vector<8x32xf32>
    %113 = vector.extract_strided_slice %104 {offsets = [0, 64], sizes = [8, 32], strides = [1, 1]} : vector<8x128xf32> to vector<8x32xf32>
    %114 = math.tanh %113 : vector<8x32xf32>
    %115 = arith.mulf %111, %95 : vector<8x32xf32>
    %116 = arith.mulf %110, %114 : vector<8x32xf32>
    %117 = arith.addf %115, %116 : vector<8x32xf32>
    %118 = math.tanh %117 : vector<8x32xf32>
    %119 = arith.mulf %112, %118 : vector<8x32xf32>
    %c4 = arith.constant 4 : index
    %c0_33 = arith.constant 0 : index
    %c0_34 = arith.constant 0 : index
    %120 = vector.load %arg14[%c4, %c0_33, %c0_34] : memref<8x8x32xf32, #tpu.memory_space<vmem>>, vector<1x8x32xf32>
    %121 = vector.shape_cast %120 : vector<1x8x32xf32> to vector<8x32xf32>
    %122 = vector.shape_cast %119 : vector<8x32xf32> to vector<1x8x32xf32>
    tpu.vector_store %arg14[%c4, %c0_33, %c0_34], %122 {strides = array<i32>} : memref<8x8x32xf32, #tpu.memory_space<vmem>>, vector<1x8x32xf32>,
    %123 = vector.extract_strided_slice %8 {offsets = [5, 0, 0], sizes = [1, 8, 128], strides = [1, 1, 1]} : vector<8x8x128xf32> to vector<1x8x128xf32>
    %124 = vector.shape_cast %123 : vector<1x8x128xf32> to vector<8x128xf32>
    %cst_35 = arith.constant dense<0.000000e+00> : vector<8x128xf32>
    %125 = tpu.matmul %119, %2, %cst_35 {dimension_numbers = #tpu.dot_dimension_numbers<[1], [0], [0], [1], [0, 0, 1, 1], [], []>} : vector<8x32xf32>, vector<32x128xf32>, vector<8x128xf32> -> vector<8x128xf32>
    %126 = arith.addf %124, %125 : vector<8x128xf32>
    %127 = arith.negf %126 : vector<8x128xf32>
    %128 = math.exp %127 : vector<8x128xf32>
    %cst_36 = arith.constant 1.000000e+00 : f32
    %129 = vector.broadcast %cst_36 : f32 to vector<8x128xf32>
    %130 = arith.addf %129, %128 : vector<8x128xf32>
    %131 = arith.divf %129, %130 : vector<8x128xf32>
    %132 = vector.extract_strided_slice %131 {offsets = [0, 0], sizes = [8, 32], strides = [1, 1]} : vector<8x128xf32> to vector<8x32xf32>
    %133 = vector.extract_strided_slice %131 {offsets = [0, 32], sizes = [8, 32], strides = [1, 1]} : vector<8x128xf32> to vector<8x32xf32>
    %134 = vector.extract_strided_slice %131 {offsets = [0, 96], sizes = [8, 32], strides = [1, 1]} : vector<8x128xf32> to vector<8x32xf32>
    %135 = vector.extract_strided_slice %126 {offsets = [0, 64], sizes = [8, 32], strides = [1, 1]} : vector<8x128xf32> to vector<8x32xf32>
    %136 = math.tanh %135 : vector<8x32xf32>
    %137 = arith.mulf %133, %117 : vector<8x32xf32>
    %138 = arith.mulf %132, %136 : vector<8x32xf32>
    %139 = arith.addf %137, %138 : vector<8x32xf32>
    %140 = math.tanh %139 : vector<8x32xf32>
    %141 = arith.mulf %134, %140 : vector<8x32xf32>
    %c5 = arith.constant 5 : index
    %c0_37 = arith.constant 0 : index
    %c0_38 = arith.constant 0 : index
    %142 = vector.load %arg14[%c5, %c0_37, %c0_38] : memref<8x8x32xf32, #tpu.memory_space<vmem>>, vector<1x8x32xf32>
    %143 = vector.shape_cast %142 : vector<1x8x32xf32> to vector<8x32xf32>
    %144 = vector.shape_cast %141 : vector<8x32xf32> to vector<1x8x32xf32>
    tpu.vector_store %arg14[%c5, %c0_37, %c0_38], %144 {strides = array<i32>} : memref<8x8x32xf32, #tpu.memory_space<vmem>>, vector<1x8x32xf32>,
    %145 = vector.extract_strided_slice %8 {offsets = [6, 0, 0], sizes = [1, 8, 128], strides = [1, 1, 1]} : vector<8x8x128xf32> to vector<1x8x128xf32>
    %146 = vector.shape_cast %145 : vector<1x8x128xf32> to vector<8x128xf32>
    %cst_39 = arith.constant dense<0.000000e+00> : vector<8x128xf32>
    %147 = tpu.matmul %141, %2, %cst_39 {dimension_numbers = #tpu.dot_dimension_numbers<[1], [0], [0], [1], [0, 0, 1, 1], [], []>} : vector<8x32xf32>, vector<32x128xf32>, vector<8x128xf32> -> vector<8x128xf32>
    %148 = arith.addf %146, %147 : vector<8x128xf32>
    %149 = arith.negf %148 : vector<8x128xf32>
    %150 = math.exp %149 : vector<8x128xf32>
    %cst_40 = arith.constant 1.000000e+00 : f32
    %151 = vector.broadcast %cst_40 : f32 to vector<8x128xf32>
    %152 = arith.addf %151, %150 : vector<8x128xf32>
    %153 = arith.divf %151, %152 : vector<8x128xf32>
    %154 = vector.extract_strided_slice %153 {offsets = [0, 0], sizes = [8, 32], strides = [1, 1]} : vector<8x128xf32> to vector<8x32xf32>
    %155 = vector.extract_strided_slice %153 {offsets = [0, 32], sizes = [8, 32], strides = [1, 1]} : vector<8x128xf32> to vector<8x32xf32>
    %156 = vector.extract_strided_slice %153 {offsets = [0, 96], sizes = [8, 32], strides = [1, 1]} : vector<8x128xf32> to vector<8x32xf32>
    %157 = vector.extract_strided_slice %148 {offsets = [0, 64], sizes = [8, 32], strides = [1, 1]} : vector<8x128xf32> to vector<8x32xf32>
    %158 = math.tanh %157 : vector<8x32xf32>
    %159 = arith.mulf %155, %139 : vector<8x32xf32>
    %160 = arith.mulf %154, %158 : vector<8x32xf32>
    %161 = arith.addf %159, %160 : vector<8x32xf32>
    %162 = math.tanh %161 : vector<8x32xf32>
    %163 = arith.mulf %156, %162 : vector<8x32xf32>
    %c6 = arith.constant 6 : index
    %c0_41 = arith.constant 0 : index
    %c0_42 = arith.constant 0 : index
    %164 = vector.load %arg14[%c6, %c0_41, %c0_42] : memref<8x8x32xf32, #tpu.memory_space<vmem>>, vector<1x8x32xf32>
    %165 = vector.shape_cast %164 : vector<1x8x32xf32> to vector<8x32xf32>
    %166 = vector.shape_cast %163 : vector<8x32xf32> to vector<1x8x32xf32>
    tpu.vector_store %arg14[%c6, %c0_41, %c0_42], %166 {strides = array<i32>} : memref<8x8x32xf32, #tpu.memory_space<vmem>>, vector<1x8x32xf32>,
    %167 = vector.extract_strided_slice %8 {offsets = [7, 0, 0], sizes = [1, 8, 128], strides = [1, 1, 1]} : vector<8x8x128xf32> to vector<1x8x128xf32>
    %168 = vector.shape_cast %167 : vector<1x8x128xf32> to vector<8x128xf32>
    %cst_43 = arith.constant dense<0.000000e+00> : vector<8x128xf32>
    %169 = tpu.matmul %163, %2, %cst_43 {dimension_numbers = #tpu.dot_dimension_numbers<[1], [0], [0], [1], [0, 0, 1, 1], [], []>} : vector<8x32xf32>, vector<32x128xf32>, vector<8x128xf32> -> vector<8x128xf32>
    %170 = arith.addf %168, %169 : vector<8x128xf32>
    %171 = arith.negf %170 : vector<8x128xf32>
    %172 = math.exp %171 : vector<8x128xf32>
    %cst_44 = arith.constant 1.000000e+00 : f32
    %173 = vector.broadcast %cst_44 : f32 to vector<8x128xf32>
    %174 = arith.addf %173, %172 : vector<8x128xf32>
    %175 = arith.divf %173, %174 : vector<8x128xf32>
    %176 = vector.extract_strided_slice %175 {offsets = [0, 0], sizes = [8, 32], strides = [1, 1]} : vector<8x128xf32> to vector<8x32xf32>
    %177 = vector.extract_strided_slice %175 {offsets = [0, 32], sizes = [8, 32], strides = [1, 1]} : vector<8x128xf32> to vector<8x32xf32>
    %178 = vector.extract_strided_slice %175 {offsets = [0, 96], sizes = [8, 32], strides = [1, 1]} : vector<8x128xf32> to vector<8x32xf32>
    %179 = vector.extract_strided_slice %170 {offsets = [0, 64], sizes = [8, 32], strides = [1, 1]} : vector<8x128xf32> to vector<8x32xf32>
    %180 = math.tanh %179 : vector<8x32xf32>
    %181 = arith.mulf %177, %161 : vector<8x32xf32>
    %182 = arith.mulf %176, %180 : vector<8x32xf32>
    %183 = arith.addf %181, %182 : vector<8x32xf32>
    %184 = math.tanh %183 : vector<8x32xf32>
    %185 = arith.mulf %178, %184 : vector<8x32xf32>
    %c7 = arith.constant 7 : index
    %c0_45 = arith.constant 0 : index
    %c0_46 = arith.constant 0 : index
    %186 = vector.load %arg14[%c7, %c0_45, %c0_46] : memref<8x8x32xf32, #tpu.memory_space<vmem>>, vector<1x8x32xf32>
    %187 = vector.shape_cast %186 : vector<1x8x32xf32> to vector<8x32xf32>
    %188 = vector.shape_cast %185 : vector<8x32xf32> to vector<1x8x32xf32>
    tpu.vector_store %arg14[%c7, %c0_45, %c0_46], %188 {strides = array<i32>} : memref<8x8x32xf32, #tpu.memory_space<vmem>>, vector<1x8x32xf32>,
    %c0_47 = arith.constant 0 : index
    %c0_48 = arith.constant 0 : index
    %c0_49 = arith.constant 0 : index
    %189 = vector.load %arg12[%c0_47, %c0_48, %c0_49] : memref<2x8x32xf32, #tpu.memory_space<vmem>>, vector<1x8x32xf32>
    %190 = vector.shape_cast %189 : vector<1x8x32xf32> to vector<8x32xf32>
    %191 = vector.shape_cast %185 : vector<8x32xf32> to vector<1x8x32xf32>
    tpu.vector_store %arg12[%c0_47, %c0_48, %c0_49], %191 {strides = array<i32>} : memref<2x8x32xf32, #tpu.memory_space<vmem>>, vector<1x8x32xf32>,
    %c0_50 = arith.constant 0 : index
    %c0_51 = arith.constant 0 : index
    %c0_52 = arith.constant 0 : index
    %192 = vector.load %arg13[%c0_50, %c0_51, %c0_52] : memref<2x8x32xf32, #tpu.memory_space<vmem>>, vector<1x8x32xf32>
    %193 = vector.shape_cast %192 : vector<1x8x32xf32> to vector<8x32xf32>
    %194 = vector.shape_cast %183 : vector<8x32xf32> to vector<1x8x32xf32>
    tpu.vector_store %arg13[%c0_50, %c0_51, %c0_52], %194 {strides = array<i32>} : memref<2x8x32xf32, #tpu.memory_space<vmem>>, vector<1x8x32xf32>,
    %c0_53 = arith.constant 0 : index
    %c0_54 = arith.constant 0 : index
    %c0_55 = arith.constant 0 : index
    %195 = vector.load %arg14[%c0_53, %c0_54, %c0_55] : memref<8x8x32xf32, #tpu.memory_space<vmem>>, vector<8x8x32xf32>
    %c0_56 = arith.constant 0 : index
    %c0_57 = arith.constant 0 : index
    %196 = vector.load %arg4[%c0_56, %c0_57] : memref<32x128xf32, #tpu.memory_space<vmem>>, vector<32x128xf32>
    %c0_58 = arith.constant 0 : index
    %c0_59 = arith.constant 0 : index
    %197 = vector.load %arg5[%c0_58, %c0_59] : memref<32x128xf32, #tpu.memory_space<vmem>>, vector<32x128xf32>
    %c0_60 = arith.constant 0 : index
    %c0_61 = arith.constant 0 : index
    %198 = vector.load %arg6[%c0_60, %c0_61] : memref<1x128xf32, #tpu.memory_space<vmem>>, vector<1x128xf32>
    %199 = vector.shape_cast %195 : vector<8x8x32xf32> to vector<64x32xf32>
    %cst_62 = arith.constant dense<0.000000e+00> : vector<64x128xf32>
    %200 = tpu.matmul %199, %196, %cst_62 {dimension_numbers = #tpu.dot_dimension_numbers<[1], [0], [0], [1], [0, 0, 1, 1], [], []>} : vector<64x32xf32>, vector<32x128xf32>, vector<64x128xf32> -> vector<64x128xf32>
    %201 = vector.broadcast %198 : vector<1x128xf32> to vector<64x128xf32>
    %202 = arith.addf %200, %201 : vector<64x128xf32>
    %203 = vector.shape_cast %202 : vector<64x128xf32> to vector<8x8x128xf32>
    %c1_63 = arith.constant 1 : index
    %c0_64 = arith.constant 0 : index
    %c0_65 = arith.constant 0 : index
    %204 = vector.load %arg7[%c1_63, %c0_64, %c0_65] : memref<2x8x32xf32, #tpu.memory_space<vmem>>, vector<1x8x32xf32>
    %205 = vector.shape_cast %204 : vector<1x8x32xf32> to vector<8x32xf32>
    %c1_66 = arith.constant 1 : index
    %c0_67 = arith.constant 0 : index
    %c0_68 = arith.constant 0 : index
    %206 = vector.load %arg8[%c1_66, %c0_67, %c0_68] : memref<2x8x32xf32, #tpu.memory_space<vmem>>, vector<1x8x32xf32>
    %207 = vector.shape_cast %206 : vector<1x8x32xf32> to vector<8x32xf32>
    %208 = vector.extract_strided_slice %203 {offsets = [0, 0, 0], sizes = [1, 8, 128], strides = [1, 1, 1]} : vector<8x8x128xf32> to vector<1x8x128xf32>
    %209 = vector.shape_cast %208 : vector<1x8x128xf32> to vector<8x128xf32>
    %cst_69 = arith.constant dense<0.000000e+00> : vector<8x128xf32>
    %210 = tpu.matmul %205, %197, %cst_69 {dimension_numbers = #tpu.dot_dimension_numbers<[1], [0], [0], [1], [0, 0, 1, 1], [], []>} : vector<8x32xf32>, vector<32x128xf32>, vector<8x128xf32> -> vector<8x128xf32>
    %211 = arith.addf %209, %210 : vector<8x128xf32>
    %212 = arith.negf %211 : vector<8x128xf32>
    %213 = math.exp %212 : vector<8x128xf32>
    %cst_70 = arith.constant 1.000000e+00 : f32
    %214 = vector.broadcast %cst_70 : f32 to vector<8x128xf32>
    %215 = arith.addf %214, %213 : vector<8x128xf32>
    %216 = arith.divf %214, %215 : vector<8x128xf32>
    %217 = vector.extract_strided_slice %216 {offsets = [0, 0], sizes = [8, 32], strides = [1, 1]} : vector<8x128xf32> to vector<8x32xf32>
    %218 = vector.extract_strided_slice %216 {offsets = [0, 32], sizes = [8, 32], strides = [1, 1]} : vector<8x128xf32> to vector<8x32xf32>
    %219 = vector.extract_strided_slice %216 {offsets = [0, 96], sizes = [8, 32], strides = [1, 1]} : vector<8x128xf32> to vector<8x32xf32>
    %220 = vector.extract_strided_slice %211 {offsets = [0, 64], sizes = [8, 32], strides = [1, 1]} : vector<8x128xf32> to vector<8x32xf32>
    %221 = math.tanh %220 : vector<8x32xf32>
    %222 = arith.mulf %218, %207 : vector<8x32xf32>
    %223 = arith.mulf %217, %221 : vector<8x32xf32>
    %224 = arith.addf %222, %223 : vector<8x32xf32>
    %225 = math.tanh %224 : vector<8x32xf32>
    %226 = arith.mulf %219, %225 : vector<8x32xf32>
    %c0_71 = arith.constant 0 : index
    %c0_72 = arith.constant 0 : index
    %c0_73 = arith.constant 0 : index
    %227 = vector.load %arg14[%c0_71, %c0_72, %c0_73] : memref<8x8x32xf32, #tpu.memory_space<vmem>>, vector<1x8x32xf32>
    %228 = vector.shape_cast %227 : vector<1x8x32xf32> to vector<8x32xf32>
    %229 = vector.shape_cast %226 : vector<8x32xf32> to vector<1x8x32xf32>
    tpu.vector_store %arg14[%c0_71, %c0_72, %c0_73], %229 {strides = array<i32>} : memref<8x8x32xf32, #tpu.memory_space<vmem>>, vector<1x8x32xf32>,
    %230 = vector.extract_strided_slice %203 {offsets = [1, 0, 0], sizes = [1, 8, 128], strides = [1, 1, 1]} : vector<8x8x128xf32> to vector<1x8x128xf32>
    %231 = vector.shape_cast %230 : vector<1x8x128xf32> to vector<8x128xf32>
    %cst_74 = arith.constant dense<0.000000e+00> : vector<8x128xf32>
    %232 = tpu.matmul %226, %197, %cst_74 {dimension_numbers = #tpu.dot_dimension_numbers<[1], [0], [0], [1], [0, 0, 1, 1], [], []>} : vector<8x32xf32>, vector<32x128xf32>, vector<8x128xf32> -> vector<8x128xf32>
    %233 = arith.addf %231, %232 : vector<8x128xf32>
    %234 = arith.negf %233 : vector<8x128xf32>
    %235 = math.exp %234 : vector<8x128xf32>
    %cst_75 = arith.constant 1.000000e+00 : f32
    %236 = vector.broadcast %cst_75 : f32 to vector<8x128xf32>
    %237 = arith.addf %236, %235 : vector<8x128xf32>
    %238 = arith.divf %236, %237 : vector<8x128xf32>
    %239 = vector.extract_strided_slice %238 {offsets = [0, 0], sizes = [8, 32], strides = [1, 1]} : vector<8x128xf32> to vector<8x32xf32>
    %240 = vector.extract_strided_slice %238 {offsets = [0, 32], sizes = [8, 32], strides = [1, 1]} : vector<8x128xf32> to vector<8x32xf32>
    %241 = vector.extract_strided_slice %238 {offsets = [0, 96], sizes = [8, 32], strides = [1, 1]} : vector<8x128xf32> to vector<8x32xf32>
    %242 = vector.extract_strided_slice %233 {offsets = [0, 64], sizes = [8, 32], strides = [1, 1]} : vector<8x128xf32> to vector<8x32xf32>
    %243 = math.tanh %242 : vector<8x32xf32>
    %244 = arith.mulf %240, %224 : vector<8x32xf32>
    %245 = arith.mulf %239, %243 : vector<8x32xf32>
    %246 = arith.addf %244, %245 : vector<8x32xf32>
    %247 = math.tanh %246 : vector<8x32xf32>
    %248 = arith.mulf %241, %247 : vector<8x32xf32>
    %c1_76 = arith.constant 1 : index
    %c0_77 = arith.constant 0 : index
    %c0_78 = arith.constant 0 : index
    %249 = vector.load %arg14[%c1_76, %c0_77, %c0_78] : memref<8x8x32xf32, #tpu.memory_space<vmem>>, vector<1x8x32xf32>
    %250 = vector.shape_cast %249 : vector<1x8x32xf32> to vector<8x32xf32>
    %251 = vector.shape_cast %248 : vector<8x32xf32> to vector<1x8x32xf32>
    tpu.vector_store %arg14[%c1_76, %c0_77, %c0_78], %251 {strides = array<i32>} : memref<8x8x32xf32, #tpu.memory_space<vmem>>, vector<1x8x32xf32>,
    %252 = vector.extract_strided_slice %203 {offsets = [2, 0, 0], sizes = [1, 8, 128], strides = [1, 1, 1]} : vector<8x8x128xf32> to vector<1x8x128xf32>
    %253 = vector.shape_cast %252 : vector<1x8x128xf32> to vector<8x128xf32>
    %cst_79 = arith.constant dense<0.000000e+00> : vector<8x128xf32>
    %254 = tpu.matmul %248, %197, %cst_79 {dimension_numbers = #tpu.dot_dimension_numbers<[1], [0], [0], [1], [0, 0, 1, 1], [], []>} : vector<8x32xf32>, vector<32x128xf32>, vector<8x128xf32> -> vector<8x128xf32>
    %255 = arith.addf %253, %254 : vector<8x128xf32>
    %256 = arith.negf %255 : vector<8x128xf32>
    %257 = math.exp %256 : vector<8x128xf32>
    %cst_80 = arith.constant 1.000000e+00 : f32
    %258 = vector.broadcast %cst_80 : f32 to vector<8x128xf32>
    %259 = arith.addf %258, %257 : vector<8x128xf32>
    %260 = arith.divf %258, %259 : vector<8x128xf32>
    %261 = vector.extract_strided_slice %260 {offsets = [0, 0], sizes = [8, 32], strides = [1, 1]} : vector<8x128xf32> to vector<8x32xf32>
    %262 = vector.extract_strided_slice %260 {offsets = [0, 32], sizes = [8, 32], strides = [1, 1]} : vector<8x128xf32> to vector<8x32xf32>
    %263 = vector.extract_strided_slice %260 {offsets = [0, 96], sizes = [8, 32], strides = [1, 1]} : vector<8x128xf32> to vector<8x32xf32>
    %264 = vector.extract_strided_slice %255 {offsets = [0, 64], sizes = [8, 32], strides = [1, 1]} : vector<8x128xf32> to vector<8x32xf32>
    %265 = math.tanh %264 : vector<8x32xf32>
    %266 = arith.mulf %262, %246 : vector<8x32xf32>
    %267 = arith.mulf %261, %265 : vector<8x32xf32>
    %268 = arith.addf %266, %267 : vector<8x32xf32>
    %269 = math.tanh %268 : vector<8x32xf32>
    %270 = arith.mulf %263, %269 : vector<8x32xf32>
    %c2_81 = arith.constant 2 : index
    %c0_82 = arith.constant 0 : index
    %c0_83 = arith.constant 0 : index
    %271 = vector.load %arg14[%c2_81, %c0_82, %c0_83] : memref<8x8x32xf32, #tpu.memory_space<vmem>>, vector<1x8x32xf32>
    %272 = vector.shape_cast %271 : vector<1x8x32xf32> to vector<8x32xf32>
    %273 = vector.shape_cast %270 : vector<8x32xf32> to vector<1x8x32xf32>
    tpu.vector_store %arg14[%c2_81, %c0_82, %c0_83], %273 {strides = array<i32>} : memref<8x8x32xf32, #tpu.memory_space<vmem>>, vector<1x8x32xf32>,
    %274 = vector.extract_strided_slice %203 {offsets = [3, 0, 0], sizes = [1, 8, 128], strides = [1, 1, 1]} : vector<8x8x128xf32> to vector<1x8x128xf32>
    %275 = vector.shape_cast %274 : vector<1x8x128xf32> to vector<8x128xf32>
    %cst_84 = arith.constant dense<0.000000e+00> : vector<8x128xf32>
    %276 = tpu.matmul %270, %197, %cst_84 {dimension_numbers = #tpu.dot_dimension_numbers<[1], [0], [0], [1], [0, 0, 1, 1], [], []>} : vector<8x32xf32>, vector<32x128xf32>, vector<8x128xf32> -> vector<8x128xf32>
    %277 = arith.addf %275, %276 : vector<8x128xf32>
    %278 = arith.negf %277 : vector<8x128xf32>
    %279 = math.exp %278 : vector<8x128xf32>
    %cst_85 = arith.constant 1.000000e+00 : f32
    %280 = vector.broadcast %cst_85 : f32 to vector<8x128xf32>
    %281 = arith.addf %280, %279 : vector<8x128xf32>
    %282 = arith.divf %280, %281 : vector<8x128xf32>
    %283 = vector.extract_strided_slice %282 {offsets = [0, 0], sizes = [8, 32], strides = [1, 1]} : vector<8x128xf32> to vector<8x32xf32>
    %284 = vector.extract_strided_slice %282 {offsets = [0, 32], sizes = [8, 32], strides = [1, 1]} : vector<8x128xf32> to vector<8x32xf32>
    %285 = vector.extract_strided_slice %282 {offsets = [0, 96], sizes = [8, 32], strides = [1, 1]} : vector<8x128xf32> to vector<8x32xf32>
    %286 = vector.extract_strided_slice %277 {offsets = [0, 64], sizes = [8, 32], strides = [1, 1]} : vector<8x128xf32> to vector<8x32xf32>
    %287 = math.tanh %286 : vector<8x32xf32>
    %288 = arith.mulf %284, %268 : vector<8x32xf32>
    %289 = arith.mulf %283, %287 : vector<8x32xf32>
    %290 = arith.addf %288, %289 : vector<8x32xf32>
    %291 = math.tanh %290 : vector<8x32xf32>
    %292 = arith.mulf %285, %291 : vector<8x32xf32>
    %c3_86 = arith.constant 3 : index
    %c0_87 = arith.constant 0 : index
    %c0_88 = arith.constant 0 : index
    %293 = vector.load %arg14[%c3_86, %c0_87, %c0_88] : memref<8x8x32xf32, #tpu.memory_space<vmem>>, vector<1x8x32xf32>
    %294 = vector.shape_cast %293 : vector<1x8x32xf32> to vector<8x32xf32>
    %295 = vector.shape_cast %292 : vector<8x32xf32> to vector<1x8x32xf32>
    tpu.vector_store %arg14[%c3_86, %c0_87, %c0_88], %295 {strides = array<i32>} : memref<8x8x32xf32, #tpu.memory_space<vmem>>, vector<1x8x32xf32>,
    %296 = vector.extract_strided_slice %203 {offsets = [4, 0, 0], sizes = [1, 8, 128], strides = [1, 1, 1]} : vector<8x8x128xf32> to vector<1x8x128xf32>
    %297 = vector.shape_cast %296 : vector<1x8x128xf32> to vector<8x128xf32>
    %cst_89 = arith.constant dense<0.000000e+00> : vector<8x128xf32>
    %298 = tpu.matmul %292, %197, %cst_89 {dimension_numbers = #tpu.dot_dimension_numbers<[1], [0], [0], [1], [0, 0, 1, 1], [], []>} : vector<8x32xf32>, vector<32x128xf32>, vector<8x128xf32> -> vector<8x128xf32>
    %299 = arith.addf %297, %298 : vector<8x128xf32>
    %300 = arith.negf %299 : vector<8x128xf32>
    %301 = math.exp %300 : vector<8x128xf32>
    %cst_90 = arith.constant 1.000000e+00 : f32
    %302 = vector.broadcast %cst_90 : f32 to vector<8x128xf32>
    %303 = arith.addf %302, %301 : vector<8x128xf32>
    %304 = arith.divf %302, %303 : vector<8x128xf32>
    %305 = vector.extract_strided_slice %304 {offsets = [0, 0], sizes = [8, 32], strides = [1, 1]} : vector<8x128xf32> to vector<8x32xf32>
    %306 = vector.extract_strided_slice %304 {offsets = [0, 32], sizes = [8, 32], strides = [1, 1]} : vector<8x128xf32> to vector<8x32xf32>
    %307 = vector.extract_strided_slice %304 {offsets = [0, 96], sizes = [8, 32], strides = [1, 1]} : vector<8x128xf32> to vector<8x32xf32>
    %308 = vector.extract_strided_slice %299 {offsets = [0, 64], sizes = [8, 32], strides = [1, 1]} : vector<8x128xf32> to vector<8x32xf32>
    %309 = math.tanh %308 : vector<8x32xf32>
    %310 = arith.mulf %306, %290 : vector<8x32xf32>
    %311 = arith.mulf %305, %309 : vector<8x32xf32>
    %312 = arith.addf %310, %311 : vector<8x32xf32>
    %313 = math.tanh %312 : vector<8x32xf32>
    %314 = arith.mulf %307, %313 : vector<8x32xf32>
    %c4_91 = arith.constant 4 : index
    %c0_92 = arith.constant 0 : index
    %c0_93 = arith.constant 0 : index
    %315 = vector.load %arg14[%c4_91, %c0_92, %c0_93] : memref<8x8x32xf32, #tpu.memory_space<vmem>>, vector<1x8x32xf32>
    %316 = vector.shape_cast %315 : vector<1x8x32xf32> to vector<8x32xf32>
    %317 = vector.shape_cast %314 : vector<8x32xf32> to vector<1x8x32xf32>
    tpu.vector_store %arg14[%c4_91, %c0_92, %c0_93], %317 {strides = array<i32>} : memref<8x8x32xf32, #tpu.memory_space<vmem>>, vector<1x8x32xf32>,
    %318 = vector.extract_strided_slice %203 {offsets = [5, 0, 0], sizes = [1, 8, 128], strides = [1, 1, 1]} : vector<8x8x128xf32> to vector<1x8x128xf32>
    %319 = vector.shape_cast %318 : vector<1x8x128xf32> to vector<8x128xf32>
    %cst_94 = arith.constant dense<0.000000e+00> : vector<8x128xf32>
    %320 = tpu.matmul %314, %197, %cst_94 {dimension_numbers = #tpu.dot_dimension_numbers<[1], [0], [0], [1], [0, 0, 1, 1], [], []>} : vector<8x32xf32>, vector<32x128xf32>, vector<8x128xf32> -> vector<8x128xf32>
    %321 = arith.addf %319, %320 : vector<8x128xf32>
    %322 = arith.negf %321 : vector<8x128xf32>
    %323 = math.exp %322 : vector<8x128xf32>
    %cst_95 = arith.constant 1.000000e+00 : f32
    %324 = vector.broadcast %cst_95 : f32 to vector<8x128xf32>
    %325 = arith.addf %324, %323 : vector<8x128xf32>
    %326 = arith.divf %324, %325 : vector<8x128xf32>
    %327 = vector.extract_strided_slice %326 {offsets = [0, 0], sizes = [8, 32], strides = [1, 1]} : vector<8x128xf32> to vector<8x32xf32>
    %328 = vector.extract_strided_slice %326 {offsets = [0, 32], sizes = [8, 32], strides = [1, 1]} : vector<8x128xf32> to vector<8x32xf32>
    %329 = vector.extract_strided_slice %326 {offsets = [0, 96], sizes = [8, 32], strides = [1, 1]} : vector<8x128xf32> to vector<8x32xf32>
    %330 = vector.extract_strided_slice %321 {offsets = [0, 64], sizes = [8, 32], strides = [1, 1]} : vector<8x128xf32> to vector<8x32xf32>
    %331 = math.tanh %330 : vector<8x32xf32>
    %332 = arith.mulf %328, %312 : vector<8x32xf32>
    %333 = arith.mulf %327, %331 : vector<8x32xf32>
    %334 = arith.addf %332, %333 : vector<8x32xf32>
    %335 = math.tanh %334 : vector<8x32xf32>
    %336 = arith.mulf %329, %335 : vector<8x32xf32>
    %c5_96 = arith.constant 5 : index
    %c0_97 = arith.constant 0 : index
    %c0_98 = arith.constant 0 : index
    %337 = vector.load %arg14[%c5_96, %c0_97, %c0_98] : memref<8x8x32xf32, #tpu.memory_space<vmem>>, vector<1x8x32xf32>
    %338 = vector.shape_cast %337 : vector<1x8x32xf32> to vector<8x32xf32>
    %339 = vector.shape_cast %336 : vector<8x32xf32> to vector<1x8x32xf32>
    tpu.vector_store %arg14[%c5_96, %c0_97, %c0_98], %339 {strides = array<i32>} : memref<8x8x32xf32, #tpu.memory_space<vmem>>, vector<1x8x32xf32>,
    %340 = vector.extract_strided_slice %203 {offsets = [6, 0, 0], sizes = [1, 8, 128], strides = [1, 1, 1]} : vector<8x8x128xf32> to vector<1x8x128xf32>
    %341 = vector.shape_cast %340 : vector<1x8x128xf32> to vector<8x128xf32>
    %cst_99 = arith.constant dense<0.000000e+00> : vector<8x128xf32>
    %342 = tpu.matmul %336, %197, %cst_99 {dimension_numbers = #tpu.dot_dimension_numbers<[1], [0], [0], [1], [0, 0, 1, 1], [], []>} : vector<8x32xf32>, vector<32x128xf32>, vector<8x128xf32> -> vector<8x128xf32>
    %343 = arith.addf %341, %342 : vector<8x128xf32>
    %344 = arith.negf %343 : vector<8x128xf32>
    %345 = math.exp %344 : vector<8x128xf32>
    %cst_100 = arith.constant 1.000000e+00 : f32
    %346 = vector.broadcast %cst_100 : f32 to vector<8x128xf32>
    %347 = arith.addf %346, %345 : vector<8x128xf32>
    %348 = arith.divf %346, %347 : vector<8x128xf32>
    %349 = vector.extract_strided_slice %348 {offsets = [0, 0], sizes = [8, 32], strides = [1, 1]} : vector<8x128xf32> to vector<8x32xf32>
    %350 = vector.extract_strided_slice %348 {offsets = [0, 32], sizes = [8, 32], strides = [1, 1]} : vector<8x128xf32> to vector<8x32xf32>
    %351 = vector.extract_strided_slice %348 {offsets = [0, 96], sizes = [8, 32], strides = [1, 1]} : vector<8x128xf32> to vector<8x32xf32>
    %352 = vector.extract_strided_slice %343 {offsets = [0, 64], sizes = [8, 32], strides = [1, 1]} : vector<8x128xf32> to vector<8x32xf32>
    %353 = math.tanh %352 : vector<8x32xf32>
    %354 = arith.mulf %350, %334 : vector<8x32xf32>
    %355 = arith.mulf %349, %353 : vector<8x32xf32>
    %356 = arith.addf %354, %355 : vector<8x32xf32>
    %357 = math.tanh %356 : vector<8x32xf32>
    %358 = arith.mulf %351, %357 : vector<8x32xf32>
    %c6_101 = arith.constant 6 : index
    %c0_102 = arith.constant 0 : index
    %c0_103 = arith.constant 0 : index
    %359 = vector.load %arg14[%c6_101, %c0_102, %c0_103] : memref<8x8x32xf32, #tpu.memory_space<vmem>>, vector<1x8x32xf32>
    %360 = vector.shape_cast %359 : vector<1x8x32xf32> to vector<8x32xf32>
    %361 = vector.shape_cast %358 : vector<8x32xf32> to vector<1x8x32xf32>
    tpu.vector_store %arg14[%c6_101, %c0_102, %c0_103], %361 {strides = array<i32>} : memref<8x8x32xf32, #tpu.memory_space<vmem>>, vector<1x8x32xf32>,
    %362 = vector.extract_strided_slice %203 {offsets = [7, 0, 0], sizes = [1, 8, 128], strides = [1, 1, 1]} : vector<8x8x128xf32> to vector<1x8x128xf32>
    %363 = vector.shape_cast %362 : vector<1x8x128xf32> to vector<8x128xf32>
    %cst_104 = arith.constant dense<0.000000e+00> : vector<8x128xf32>
    %364 = tpu.matmul %358, %197, %cst_104 {dimension_numbers = #tpu.dot_dimension_numbers<[1], [0], [0], [1], [0, 0, 1, 1], [], []>} : vector<8x32xf32>, vector<32x128xf32>, vector<8x128xf32> -> vector<8x128xf32>
    %365 = arith.addf %363, %364 : vector<8x128xf32>
    %366 = arith.negf %365 : vector<8x128xf32>
    %367 = math.exp %366 : vector<8x128xf32>
    %cst_105 = arith.constant 1.000000e+00 : f32
    %368 = vector.broadcast %cst_105 : f32 to vector<8x128xf32>
    %369 = arith.addf %368, %367 : vector<8x128xf32>
    %370 = arith.divf %368, %369 : vector<8x128xf32>
    %371 = vector.extract_strided_slice %370 {offsets = [0, 0], sizes = [8, 32], strides = [1, 1]} : vector<8x128xf32> to vector<8x32xf32>
    %372 = vector.extract_strided_slice %370 {offsets = [0, 32], sizes = [8, 32], strides = [1, 1]} : vector<8x128xf32> to vector<8x32xf32>
    %373 = vector.extract_strided_slice %370 {offsets = [0, 96], sizes = [8, 32], strides = [1, 1]} : vector<8x128xf32> to vector<8x32xf32>
    %374 = vector.extract_strided_slice %365 {offsets = [0, 64], sizes = [8, 32], strides = [1, 1]} : vector<8x128xf32> to vector<8x32xf32>
    %375 = math.tanh %374 : vector<8x32xf32>
    %376 = arith.mulf %372, %356 : vector<8x32xf32>
    %377 = arith.mulf %371, %375 : vector<8x32xf32>
    %378 = arith.addf %376, %377 : vector<8x32xf32>
    %379 = math.tanh %378 : vector<8x32xf32>
    %380 = arith.mulf %373, %379 : vector<8x32xf32>
    %c7_106 = arith.constant 7 : index
    %c0_107 = arith.constant 0 : index
    %c0_108 = arith.constant 0 : index
    %381 = vector.load %arg14[%c7_106, %c0_107, %c0_108] : memref<8x8x32xf32, #tpu.memory_space<vmem>>, vector<1x8x32xf32>
    %382 = vector.shape_cast %381 : vector<1x8x32xf32> to vector<8x32xf32>
    %383 = vector.shape_cast %380 : vector<8x32xf32> to vector<1x8x32xf32>
    tpu.vector_store %arg14[%c7_106, %c0_107, %c0_108], %383 {strides = array<i32>} : memref<8x8x32xf32, #tpu.memory_space<vmem>>, vector<1x8x32xf32>,
    %c1_109 = arith.constant 1 : index
    %c0_110 = arith.constant 0 : index
    %c0_111 = arith.constant 0 : index
    %384 = vector.load %arg12[%c1_109, %c0_110, %c0_111] : memref<2x8x32xf32, #tpu.memory_space<vmem>>, vector<1x8x32xf32>
    %385 = vector.shape_cast %384 : vector<1x8x32xf32> to vector<8x32xf32>
    %386 = vector.shape_cast %380 : vector<8x32xf32> to vector<1x8x32xf32>
    tpu.vector_store %arg12[%c1_109, %c0_110, %c0_111], %386 {strides = array<i32>} : memref<2x8x32xf32, #tpu.memory_space<vmem>>, vector<1x8x32xf32>,
    %c1_112 = arith.constant 1 : index
    %c0_113 = arith.constant 0 : index
    %c0_114 = arith.constant 0 : index
    %387 = vector.load %arg13[%c1_112, %c0_113, %c0_114] : memref<2x8x32xf32, #tpu.memory_space<vmem>>, vector<1x8x32xf32>
    %388 = vector.shape_cast %387 : vector<1x8x32xf32> to vector<8x32xf32>
    %389 = vector.shape_cast %378 : vector<8x32xf32> to vector<1x8x32xf32>
    tpu.vector_store %arg13[%c1_112, %c0_113, %c0_114], %389 {strides = array<i32>} : memref<2x8x32xf32, #tpu.memory_space<vmem>>, vector<1x8x32xf32>,
    %c0_115 = arith.constant 0 : index
    %c0_116 = arith.constant 0 : index
    %c0_117 = arith.constant 0 : index
    %390 = vector.load %arg14[%c0_115, %c0_116, %c0_117] : memref<8x8x32xf32, #tpu.memory_space<vmem>>, vector<8x8x32xf32>
    %391 = vector.shape_cast %390 : vector<8x8x32xf32> to vector<64x32xf32>
    %c0_118 = arith.constant 0 : index
    %c0_119 = arith.constant 0 : index
    %392 = vector.load %arg9[%c0_118, %c0_119] : memref<32x1xf32, #tpu.memory_space<vmem>>, vector<32x1xf32>
    %cst_120 = arith.constant dense<0.000000e+00> : vector<64x1xf32>
    %393 = tpu.matmul %391, %392, %cst_120 {dimension_numbers = #tpu.dot_dimension_numbers<[1], [0], [0], [1], [0, 0, 1, 1], [], []>} : vector<64x32xf32>, vector<32x1xf32>, vector<64x1xf32> -> vector<64x1xf32>
    %c0_121 = arith.constant 0 : index
    %c0_122 = arith.constant 0 : index
    %394 = vector.load %arg10[%c0_121, %c0_122] : memref<1x1xf32, #tpu.memory_space<vmem>>, vector<1x1xf32>
    %395 = vector.broadcast %394 : vector<1x1xf32> to vector<64x1xf32>
    %396 = arith.addf %393, %395 : vector<64x1xf32>
    %c0_123 = arith.constant 0 : index
    %c0_124 = arith.constant 0 : index
    %397 = vector.load %arg11[%c0_123, %c0_124] : memref<64x1xf32, #tpu.memory_space<vmem>>, vector<64x1xf32>
    tpu.vector_store %arg11[%c0_123, %c0_124], %396 {strides = array<i32>} : memref<64x1xf32, #tpu.memory_space<vmem>>, vector<64x1xf32>,
    return
  }
}

</mosaic_0001>

<llo_original>
// kernel: tpu_custom_call.1
$region0: #{tpu_custom_call.1}
  #allocation0 [shape = 'u32[]', space=smem, size = 0x4, offset = 0x4, fixed_abs, tag = 'smem constant byte address 0x4 - core index']
  #allocation1 [shape = 'u32[72,128]{1,0:T(1,128)}', space=vmem, size = 0x9000, scoped, tag = 'internal scratch']
  #allocation2 [shape = 'f32[8,8,32]{2,1,0:T(8,128)}', space=vmem, size = 0x8000, scoped, tag = 'scratch operand']
  #allocation3 [shape = 'f32[1,1]{1,0:T(1,128)S(1)}', space=vmem, size = 0x200, scoped, tag = 'scoped memory for tpu_custom_call.1']
  %s0 = inlined_call_operand.vmem [shape: f32[8,8,4], index: 0, kind: input, shape index: {}]
  %s1 = inlined_call_operand.hbm [shape: f32[4,128], index: 1, kind: input, shape index: {}]
  %s2 = inlined_call_operand.vmem [shape: f32[32,128], index: 2, kind: input, shape index: {}]
  %s3 = inlined_call_operand.vmem [shape: f32[1,128], index: 3, kind: input, shape index: {}]
  %s4 = inlined_call_operand.vmem [shape: f32[32,128], index: 4, kind: input, shape index: {}]
  %s5 = inlined_call_operand.vmem [shape: f32[32,128], index: 5, kind: input, shape index: {}]
  %s6 = inlined_call_operand.vmem [shape: f32[1,128], index: 6, kind: input, shape index: {}]
  %s7 = inlined_call_operand.hbm [shape: f32[2,8,32], index: 7, kind: input, shape index: {}]
  %s8 = inlined_call_operand.hbm [shape: f32[2,8,32], index: 8, kind: input, shape index: {}]
  %s9 = inlined_call_operand.vmem [shape: f32[32,1], index: 9, kind: input, shape index: {}]
  %s10 = inlined_call_operand.<no memory space> [shape: f32[1,1], index: 10, kind: input, shape index: {}]
  %s11 = inlined_call_operand.vmem [shape: f32[64,1], index: 11, kind: output, shape index: {0}]
  %s12 = inlined_call_operand.hbm [shape: f32[2,8,32], index: 12, kind: output, shape index: {1}]
  %s13 = inlined_call_operand.hbm [shape: f32[2,8,32], index: 13, kind: output, shape index: {2}]
  %14 = xla_tuple %s11, %s12, %s13
  %s15 = sld [smem:[#allocation0]]
  $region82: #{tpu_custom_call.1} parent=0
    _
  %s17 = ssub.s32 1, %s15
  %s18 = scalar_select 0, %s17, %s15
  %v19 = vstv %s10
  %20 = vst [vmem:[#allocation3] sm:$0x1] %v19
  $region1: #{tpu_custom_call.1} parent=0
    #allocation4 [shape = 'u8[2048]{0}', space=vmem, size = 0x800, scoped, tag = 'input window, operand 1, single buffered']
    #allocation5 [shape = 's32[1]{0}', space=sflag, size = 0x4, scoped, tag = 'scoped memory for tpu_custom_call.1']
    #allocation6 [shape = 's32[1]{0}', space=sflag, size = 0x4, scoped, tag = 'scoped memory for tpu_custom_call.1']
    #allocation7 [shape = 'u8[8192]{0}', space=vmem, size = 0x2000, scoped, tag = 'input window, operand 7, single buffered']
    #allocation8 [shape = 's32[1]{0}', space=sflag, size = 0x4, scoped, tag = 'scoped memory for tpu_custom_call.1']
    #allocation9 [shape = 'u8[8192]{0}', space=vmem, size = 0x2000, scoped, tag = 'input window, operand 8, single buffered']
    #allocation10 [shape = 'u8[8192]{0}', space=vmem, size = 0x2000, scoped, tag = 'output window, operand 1, single buffered']
    #allocation11 [shape = 'u8[8192]{0}', space=vmem, size = 0x2000, scoped, tag = 'output window, operand 2, single buffered']
    #allocation12 [shape = 's32[1]{0}', space=sflag, size = 0x4, scoped, tag = 'scoped memory for tpu_custom_call.1']
    %21 = vsyncpa [#allocation5], 0
    %22 = vsyncpa [#allocation8], 0
    %23 = vsyncpa [#allocation6], 0
    %24 = vsyncpa [#allocation12], 0
    // Predicated region
    $region2: #{tpu_custom_call.1} parent=1 // pred_check
      _
    $region3: #{tpu_custom_call.1} parent=1 // pred_check_branch
      %26 = sbr.rel (0) target = $region5
    $region4: #{tpu_custom_call.1} parent=1 // pred_region
      _
    $region5: #{tpu_custom_call.1} parent=1 // pred_fallthru
      _
    // Predicated region
    $region6: #{tpu_custom_call.1} parent=1 // pred_check
      _
    $region7: #{tpu_custom_call.1} parent=1 // pred_check_branch
      %28 = sbr.rel (0) target = $region9
    $region8: #{tpu_custom_call.1} parent=1 // pred_region
      %30 = vsyncadd [#allocation5], 0
      %s32 = sshll.u32 %s1, 4
      %s33 = int_to_ptr.hbm [resolvable:$true] %s32
      %s34 = sshll.u32 [#allocation4], 4
      %s35 = int_to_ptr.vmem [resolvable:$true] %s34
      %37 = dma.hbm_to_vmem [thread:$0]  %s33, 64, %s35, [#allocation5]
    $region9: #{tpu_custom_call.1} parent=1 // pred_fallthru
      _
    // Predicated region
    $region10: #{tpu_custom_call.1} parent=1 // pred_check
      _
    $region11: #{tpu_custom_call.1} parent=1 // pred_check_branch
      %39 = sbr.rel (0) target = $region13
    $region12: #{tpu_custom_call.1} parent=1 // pred_region
      _
    $region13: #{tpu_custom_call.1} parent=1 // pred_fallthru
      _
    // Predicated region
    $region14: #{tpu_custom_call.1} parent=1 // pred_check
      _
    $region15: #{tpu_custom_call.1} parent=1 // pred_check_branch
      %41 = sbr.rel (0) target = $region17
    $region16: #{tpu_custom_call.1} parent=1 // pred_region
      _
    $region17: #{tpu_custom_call.1} parent=1 // pred_fallthru
      _
    // Predicated region
    $region18: #{tpu_custom_call.1} parent=1 // pred_check
      _
    $region19: #{tpu_custom_call.1} parent=1 // pred_check_branch
      %43 = sbr.rel (0) target = $region21
    $region20: #{tpu_custom_call.1} parent=1 // pred_region
      _
    $region21: #{tpu_custom_call.1} parent=1 // pred_fallthru
      _
    // Predicated region
    $region22: #{tpu_custom_call.1} parent=1 // pred_check
      _
    $region23: #{tpu_custom_call.1} parent=1 // pred_check_branch
      %45 = sbr.rel (0) target = $region25
    $region24: #{tpu_custom_call.1} parent=1 // pred_region
      _
    $region25: #{tpu_custom_call.1} parent=1 // pred_fallthru
      _
    // Predicated region
    $region26: #{tpu_custom_call.1} parent=1 // pred_check
      _
    $region27: #{tpu_custom_call.1} parent=1 // pred_check_branch
      %47 = sbr.rel (0) target = $region29
    $region28: #{tpu_custom_call.1} parent=1 // pred_region
      _
    $region29: #{tpu_custom_call.1} parent=1 // pred_fallthru
      _
    // Predicated region
    $region30: #{tpu_custom_call.1} parent=1 // pred_check
      _
    $region31: #{tpu_custom_call.1} parent=1 // pred_check_branch
      %49 = sbr.rel (0) target = $region33
    $region32: #{tpu_custom_call.1} parent=1 // pred_region
      %51 = vsyncadd [#allocation8], 0
      %s52 = sshll.u32 %s7, 4
      %s53 = int_to_ptr.hbm [resolvable:$true] %s52
      %s54 = sshll.u32 [#allocation7], 4
      %s55 = int_to_ptr.vmem [resolvable:$true] %s54
      %60 = dma.hbm_to_vmem [thread:$0]  %s53, 256, %s55, [#allocation8], 128, 128, 8
    $region33: #{tpu_custom_call.1} parent=1 // pred_fallthru
      _
    // Predicated region
    $region34: #{tpu_custom_call.1} parent=1 // pred_check
      _
    $region35: #{tpu_custom_call.1} parent=1 // pred_check_branch
      %62 = sbr.rel (0) target = $region37
    $region36: #{tpu_custom_call.1} parent=1 // pred_region
      %64 = vsyncadd [#allocation8], 0
      %s65 = sshll.u32 %s8, 4
      %s66 = int_to_ptr.hbm [resolvable:$true] %s65
      %s67 = sshll.u32 [#allocation9], 4
      %s68 = int_to_ptr.vmem [resolvable:$true] %s67
      %73 = dma.hbm_to_vmem [thread:$0]  %s66, 256, %s68, [#allocation8], 128, 128, 8
    $region37: #{tpu_custom_call.1} parent=1 // pred_fallthru
      _
    // Predicated region
    $region38: #{tpu_custom_call.1} parent=1 // pred_check
      _
    $region39: #{tpu_custom_call.1} parent=1 // pred_check_branch
      %75 = sbr.rel (0) target = $region41
    $region40: #{tpu_custom_call.1} parent=1 // pred_region
      _
    $region41: #{tpu_custom_call.1} parent=1 // pred_fallthru
      _
    // Predicated region
    $region42: #{tpu_custom_call.1} parent=1 // pred_check
      _
    $region43: #{tpu_custom_call.1} parent=1 // pred_check_branch
      %77 = sbr.rel (0) target = $region45
    $region44: #{tpu_custom_call.1} parent=1 // pred_region
      _
    $region45: #{tpu_custom_call.1} parent=1 // pred_fallthru
      _
    // Predicated region
    $region46: #{tpu_custom_call.1} parent=1 // pred_check
      _
    $region47: #{tpu_custom_call.1} parent=1 // pred_check_branch
      %79 = sbr.rel (0) target = $region49
    $region48: #{tpu_custom_call.1} parent=1 // pred_region
      %81 = dma.done [#allocation5], 64
    $region49: #{tpu_custom_call.1} parent=1 // pred_fallthru
      _
    // Predicated region
    $region50: #{tpu_custom_call.1} parent=1 // pred_check
      _
    $region51: #{tpu_custom_call.1} parent=1 // pred_check_branch
      %83 = sbr.rel (0) target = $region53
    $region52: #{tpu_custom_call.1} parent=1 // pred_region
      %85 = dma.done [#allocation8], 256
    $region53: #{tpu_custom_call.1} parent=1 // pred_fallthru
      _
    // Predicated region
    $region54: #{tpu_custom_call.1} parent=1 // pred_check
      _
    $region55: #{tpu_custom_call.1} parent=1 // pred_check_branch
      %87 = sbr.rel (0) target = $region57
    $region56: #{tpu_custom_call.1} parent=1 // pred_region
      %89 = dma.done [#allocation8], 256
    $region57: #{tpu_custom_call.1} parent=1 // pred_fallthru
      _
    %v90 = vld [vmem:[%s0] sm:$0xff]
    %v91 = vld [vmem:[%s0 + $0x8] sm:$0xff]
    %v92 = vld [vmem:[%s0 + $0x10] sm:$0xff]
    %v93 = vld [vmem:[%s0 + $0x18] sm:$0xff]
    %v94 = vld [vmem:[%s0 + $0x20] sm:$0xff]
    %v95 = vld [vmem:[%s0 + $0x28] sm:$0xff]
    %v96 = vld [vmem:[%s0 + $0x30] sm:$0xff]
    %v97 = vld [vmem:[%s0 + $0x38] sm:$0xff]
    %v98 = vld [vmem:[#allocation4] sm:$0xf]
    %v99 = vld [vmem:[%s2] sm:$0xff]
    %v100 = vld [vmem:[%s2 + $0x8] sm:$0xff]
    %v101 = vld [vmem:[%s2 + $0x10] sm:$0xff]
    %v102 = vld [vmem:[%s2 + $0x18] sm:$0xff]
    %v103 = vld [vmem:[%s3] sm:$0x1]
    %v105 = vperm.slane %v103, 0
    %vm107 = vcmask 31744
    %v109 = vsel %vm107, %v90, 0
    %v112 = vsel %vm107, %v91, 0
    %v115 = vsel %vm107, %v92, 0
    %v118 = vsel %vm107, %v93, 0
    %v121 = vsel %vm107, %v94, 0
    %v124 = vsel %vm107, %v95, 0
    %v127 = vsel %vm107, %v96, 0
    %v130 = vsel %vm107, %v97, 0
    %vm132 = vcmask 1043456
    %v134 = vsel %vm132, %v98, 0
    %136 = vmatpush.msra.mxu0 0.0
    %137 = vmatpush.msra.mxu0 0.0
    %138 = vmatpush.msra.mxu0 0.0
    %139 = vmatpush.msra.mxu0 0.0
    %140 = vmatpush.msra.mxu0 0.0
    %141 = vmatpush.msra.mxu0 0.0
    %142 = vmatpush.msra.mxu0 0.0
    %143 = vmatpush.msra.mxu0 0.0
    %144 = vmatpush.msra.mxu0 0.0
    %145 = vmatpush.msra.mxu0 0.0
    %146 = vmatpush.msra.mxu0 0.0
    %147 = vmatpush.msra.mxu0 0.0
    %148 = vmatpush.msra.mxu0 0.0
    %149 = vmatpush.msra.mxu0 0.0
    %150 = vmatpush.msra.mxu0 0.0
    %151 = vmatpush.msra.mxu0 %v134
    %152 = vmatmul.f32.gmra.mxu0 %v109
    %v153 = vpop.f32.mrf.mxu0
    %v154 = vadd.f32 %v105, %v153
    %155 = vmatmul.f32.gmra.mxu0 %v112
    %v156 = vpop.f32.mrf.mxu0
    %v157 = vadd.f32 %v105, %v156
    %158 = vmatmul.f32.gmra.mxu0 %v115
    %v159 = vpop.f32.mrf.mxu0
    %v160 = vadd.f32 %v105, %v159
    %161 = vmatmul.f32.gmra.mxu0 %v118
    %v162 = vpop.f32.mrf.mxu0
    %v163 = vadd.f32 %v105, %v162
    %164 = vmatmul.f32.gmra.mxu0 %v121
    %v165 = vpop.f32.mrf.mxu0
    %v166 = vadd.f32 %v105, %v165
    %167 = vmatmul.f32.gmra.mxu0 %v124
    %v168 = vpop.f32.mrf.mxu0
    %v169 = vadd.f32 %v105, %v168
    %170 = vmatmul.f32.gmra.mxu0 %v127
    %v171 = vpop.f32.mrf.mxu0
    %v172 = vadd.f32 %v105, %v171
    %173 = vmatmul.f32.gmra.mxu0 %v130
    %v174 = vpop.f32.mrf.mxu0
    %v175 = vadd.f32 %v105, %v174
    %176 = vdwg.mxu0
    %v177 = vld [vmem:[#allocation7] sm:$0xff]
    %v178 = vld [vmem:[#allocation9] sm:$0xff]
    %vm179 = vcmask 261120
    %v181 = vsel %vm179, %v177, 0
    %183 = vmatpush.msra.mxu0 0.0
    %184 = vmatpush.msra.mxu0 0.0
    %185 = vmatpush.msra.mxu0 0.0
    %186 = vmatpush.msra.mxu0 0.0
    %187 = vmatpush.msra.mxu0 0.0
    %188 = vmatpush.msra.mxu0 0.0
    %189 = vmatpush.msra.mxu0 0.0
    %190 = vmatpush.msra.mxu0 0.0
    %191 = vmatpush.msra.mxu0 0.0
    %192 = vmatpush.msra.mxu0 0.0
    %193 = vmatpush.msra.mxu0 0.0
    %194 = vmatpush.msra.mxu0 0.0
    %195 = vmatpush.msra.mxu0 %v102
    %196 = vmatpush.msra.mxu0 %v101
    %197 = vmatpush.msra.mxu0 %v100
    %198 = vmatpush.msra.mxu0 %v99
    %199 = vmatmul.f32.gmra.mxu0 %v181
    %v200 = vpop.f32.mrf.mxu0
    %v201 = vadd.f32 0.0, %v200
    %202 = vdwg.mxu0
    %v203 = vadd.f32 %v154, %v201
    %v204 = vxor.u32 %v203, 2147483648
    %v205 = vmul.f32 %v204, 1.442695
    %v206 = vpow.pop %v205
    %v207 = vadd.f32 %v206, 1.0
    %v208 = vrcp.pop %v207
    %v209 = vmul.f32 %v207, %v208
    %v210 = vsub.f32 1.0, %v209
    %v211 = vmul.f32 %v208, %v210
    %v212 = vadd.f32 %v208, %v211
    %vm213 = vweird.f32 %v207
    %vm214 = vweird.f32 %v208
    %vm215 = vmor %vm213, %vm214
    %v216 = vsel %vm215, %v208, %v212
    %v217 = vand.u32 2147483647, %v207
    %vm218 = vcmp.eq.f32.partialorder %v217, 8.507059e+37
    %v219 = vand.u32 %v207, 2147483648
    %v220 = vor.u32 1.1754944e-38, %v219
    %v221 = vsel %vm218, %v220, %v216
    %v222 = vmul.f32 1.0, %v221
    %v223 = vtanh.pop %v203
    %225 = vrot.lane.b32.xlu0 %v178, 32
    %v226 = vpop.permute.xlu0 %225
    %v228 = vmul.f32 %v222, %v226
    %230 = vrot.lane.b32.xlu0 %v223, 64
    %v231 = vpop.permute.xlu0 %230
    %v233 = vmul.f32 %v222, %v231
    %235 = vrot.lane.b32.xlu0 %v233, 32
    %v236 = vpop.permute.xlu0 %235
    %v238 = vadd.f32 %v228, %v236
    %v239 = vtanh.pop %v238
    %241 = vrot.lane.b32.xlu0 %v239, 64
    %v242 = vpop.permute.xlu0 %241
    %v244 = vmul.f32 %v222, %v242
    %246 = vrot.lane.b32.xlu0 %v244, 32
    %v247 = vpop.permute.xlu0 %246
    %249 = vst.msk [vmem:[#allocation2] sm:$0xff] %vm179, %v247
    %v250 = vsel %vm179, %v247, 0
    %252 = vmatpush.msra.mxu0 0.0
    %253 = vmatpush.msra.mxu0 0.0
    %254 = vmatpush.msra.mxu0 0.0
    %255 = vmatpush.msra.mxu0 0.0
    %256 = vmatpush.msra.mxu0 0.0
    %257 = vmatpush.msra.mxu0 0.0
    %258 = vmatpush.msra.mxu0 0.0
    %259 = vmatpush.msra.mxu0 0.0
    %260 = vmatpush.msra.mxu0 0.0
    %261 = vmatpush.msra.mxu0 0.0
    %262 = vmatpush.msra.mxu0 0.0
    %263 = vmatpush.msra.mxu0 0.0
    %264 = vmatpush.msra.mxu0 %v102
    %265 = vmatpush.msra.mxu0 %v101
    %266 = vmatpush.msra.mxu0 %v100
    %267 = vmatpush.msra.mxu0 %v99
    %268 = vmatmul.f32.gmra.mxu0 %v250
    %v269 = vpop.f32.mrf.mxu0
    %v270 = vadd.f32 0.0, %v269
    %271 = vdwg.mxu0
    %v272 = vadd.f32 %v157, %v270
    %v273 = vxor.u32 %v272, 2147483648
    %v274 = vmul.f32 %v273, 1.442695
    %v275 = vpow.pop %v274
    %v276 = vadd.f32 %v275, 1.0
    %v277 = vrcp.pop %v276
    %v278 = vmul.f32 %v276, %v277
    %v279 = vsub.f32 1.0, %v278
    %v280 = vmul.f32 %v277, %v279
    %v281 = vadd.f32 %v277, %v280
    %vm282 = vweird.f32 %v276
    %vm283 = vweird.f32 %v277
    %vm284 = vmor %vm282, %vm283
    %v285 = vsel %vm284, %v277, %v281
    %v286 = vand.u32 2147483647, %v276
    %vm287 = vcmp.eq.f32.partialorder %v286, 8.507059e+37
    %v288 = vand.u32 %v276, 2147483648
    %v289 = vor.u32 1.1754944e-38, %v288
    %v290 = vsel %vm287, %v289, %v285
    %v291 = vmul.f32 1.0, %v290
    %v292 = vtanh.pop %v272
    %v293 = vmul.f32 %v291, %v238
    %295 = vrot.lane.b32.xlu0 %v292, 64
    %v296 = vpop.permute.xlu0 %295
    %v298 = vmul.f32 %v291, %v296
    %300 = vrot.lane.b32.xlu0 %v298, 32
    %v301 = vpop.permute.xlu0 %300
    %v303 = vadd.f32 %v293, %v301
    %v304 = vtanh.pop %v303
    %306 = vrot.lane.b32.xlu0 %v304, 64
    %v307 = vpop.permute.xlu0 %306
    %v309 = vmul.f32 %v291, %v307
    %311 = vrot.lane.b32.xlu0 %v309, 32
    %v312 = vpop.permute.xlu0 %311
    %s314 = scalar_lea.vmem [#allocation2], 8
    %315 = vst.msk [vmem:[%s314] sm:$0xff] %vm179, %v312
    %v316 = vsel %vm179, %v312, 0
    %318 = vmatpush.msra.mxu0 0.0
    %319 = vmatpush.msra.mxu0 0.0
    %320 = vmatpush.msra.mxu0 0.0
    %321 = vmatpush.msra.mxu0 0.0
    %322 = vmatpush.msra.mxu0 0.0
    %323 = vmatpush.msra.mxu0 0.0
    %324 = vmatpush.msra.mxu0 0.0
    %325 = vmatpush.msra.mxu0 0.0
    %326 = vmatpush.msra.mxu0 0.0
    %327 = vmatpush.msra.mxu0 0.0
    %328 = vmatpush.msra.mxu0 0.0
    %329 = vmatpush.msra.mxu0 0.0
    %330 = vmatpush.msra.mxu0 %v102
    %331 = vmatpush.msra.mxu0 %v101
    %332 = vmatpush.msra.mxu0 %v100
    %333 = vmatpush.msra.mxu0 %v99
    %334 = vmatmul.f32.gmra.mxu0 %v316
    %v335 = vpop.f32.mrf.mxu0
    %v336 = vadd.f32 0.0, %v335
    %337 = vdwg.mxu0
    %v338 = vadd.f32 %v160, %v336
    %v339 = vxor.u32 %v338, 2147483648
    %v340 = vmul.f32 %v339, 1.442695
    %v341 = vpow.pop %v340
    %v342 = vadd.f32 %v341, 1.0
    %v343 = vrcp.pop %v342
    %v344 = vmul.f32 %v342, %v343
    %v345 = vsub.f32 1.0, %v344
    %v346 = vmul.f32 %v343, %v345
    %v347 = vadd.f32 %v343, %v346
    %vm348 = vweird.f32 %v342
    %vm349 = vweird.f32 %v343
    %vm350 = vmor %vm348, %vm349
    %v351 = vsel %vm350, %v343, %v347
    %v352 = vand.u32 2147483647, %v342
    %vm353 = vcmp.eq.f32.partialorder %v352, 8.507059e+37
    %v354 = vand.u32 %v342, 2147483648
    %v355 = vor.u32 1.1754944e-38, %v354
    %v356 = vsel %vm353, %v355, %v351
    %v357 = vmul.f32 1.0, %v356
    %v358 = vtanh.pop %v338
    %v359 = vmul.f32 %v357, %v303
    %361 = vrot.lane.b32.xlu0 %v358, 64
    %v362 = vpop.permute.xlu0 %361
    %v364 = vmul.f32 %v357, %v362
    %366 = vrot.lane.b32.xlu0 %v364, 32
    %v367 = vpop.permute.xlu0 %366
    %v369 = vadd.f32 %v359, %v367
    %v370 = vtanh.pop %v369
    %372 = vrot.lane.b32.xlu0 %v370, 64
    %v373 = vpop.permute.xlu0 %372
    %v375 = vmul.f32 %v357, %v373
    %377 = vrot.lane.b32.xlu0 %v375, 32
    %v378 = vpop.permute.xlu0 %377
    %s380 = scalar_lea.vmem [#allocation2], 16
    %381 = vst.msk [vmem:[%s380] sm:$0xff] %vm179, %v378
    %v382 = vsel %vm179, %v378, 0
    %384 = vmatpush.msra.mxu0 0.0
    %385 = vmatpush.msra.mxu0 0.0
    %386 = vmatpush.msra.mxu0 0.0
    %387 = vmatpush.msra.mxu0 0.0
    %388 = vmatpush.msra.mxu0 0.0
    %389 = vmatpush.msra.mxu0 0.0
    %390 = vmatpush.msra.mxu0 0.0
    %391 = vmatpush.msra.mxu0 0.0
    %392 = vmatpush.msra.mxu0 0.0
    %393 = vmatpush.msra.mxu0 0.0
    %394 = vmatpush.msra.mxu0 0.0
    %395 = vmatpush.msra.mxu0 0.0
    %396 = vmatpush.msra.mxu0 %v102
    %397 = vmatpush.msra.mxu0 %v101
    %398 = vmatpush.msra.mxu0 %v100
    %399 = vmatpush.msra.mxu0 %v99
    %400 = vmatmul.f32.gmra.mxu0 %v382
    %v401 = vpop.f32.mrf.mxu0
    %v402 = vadd.f32 0.0, %v401
    %403 = vdwg.mxu0
    %v404 = vadd.f32 %v163, %v402
    %v405 = vxor.u32 %v404, 2147483648
    %v406 = vmul.f32 %v405, 1.442695
    %v407 = vpow.pop %v406
    %v408 = vadd.f32 %v407, 1.0
    %v409 = vrcp.pop %v408
    %v410 = vmul.f32 %v408, %v409
    %v411 = vsub.f32 1.0, %v410
    %v412 = vmul.f32 %v409, %v411
    %v413 = vadd.f32 %v409, %v412
    %vm414 = vweird.f32 %v408
    %vm415 = vweird.f32 %v409
    %vm416 = vmor %vm414, %vm415
    %v417 = vsel %vm416, %v409, %v413
    %v418 = vand.u32 2147483647, %v408
    %vm419 = vcmp.eq.f32.partialorder %v418, 8.507059e+37
    %v420 = vand.u32 %v408, 2147483648
    %v421 = vor.u32 1.1754944e-38, %v420
    %v422 = vsel %vm419, %v421, %v417
    %v423 = vmul.f32 1.0, %v422
    %v424 = vtanh.pop %v404
    %v425 = vmul.f32 %v423, %v369
    %427 = vrot.lane.b32.xlu0 %v424, 64
    %v428 = vpop.permute.xlu0 %427
    %v430 = vmul.f32 %v423, %v428
    %432 = vrot.lane.b32.xlu0 %v430, 32
    %v433 = vpop.permute.xlu0 %432
    %v435 = vadd.f32 %v425, %v433
    %v436 = vtanh.pop %v435
    %438 = vrot.lane.b32.xlu0 %v436, 64
    %v439 = vpop.permute.xlu0 %438
    %v441 = vmul.f32 %v423, %v439
    %443 = vrot.lane.b32.xlu0 %v441, 32
    %v444 = vpop.permute.xlu0 %443
    %s446 = scalar_lea.vmem [#allocation2], 24
    %447 = vst.msk [vmem:[%s446] sm:$0xff] %vm179, %v444
    %v448 = vsel %vm179, %v444, 0
    %450 = vmatpush.msra.mxu0 0.0
    %451 = vmatpush.msra.mxu0 0.0
    %452 = vmatpush.msra.mxu0 0.0
    %453 = vmatpush.msra.mxu0 0.0
    %454 = vmatpush.msra.mxu0 0.0
    %455 = vmatpush.msra.mxu0 0.0
    %456 = vmatpush.msra.mxu0 0.0
    %457 = vmatpush.msra.mxu0 0.0
    %458 = vmatpush.msra.mxu0 0.0
    %459 = vmatpush.msra.mxu0 0.0
    %460 = vmatpush.msra.mxu0 0.0
    %461 = vmatpush.msra.mxu0 0.0
    %462 = vmatpush.msra.mxu0 %v102
    %463 = vmatpush.msra.mxu0 %v101
    %464 = vmatpush.msra.mxu0 %v100
    %465 = vmatpush.msra.mxu0 %v99
    %466 = vmatmul.f32.gmra.mxu0 %v448
    %v467 = vpop.f32.mrf.mxu0
    %v468 = vadd.f32 0.0, %v467
    %469 = vdwg.mxu0
    %v470 = vadd.f32 %v166, %v468
    %v471 = vxor.u32 %v470, 2147483648
    %v472 = vmul.f32 %v471, 1.442695
    %v473 = vpow.pop %v472
    %v474 = vadd.f32 %v473, 1.0
    %v475 = vrcp.pop %v474
    %v476 = vmul.f32 %v474, %v475
    %v477 = vsub.f32 1.0, %v476
    %v478 = vmul.f32 %v475, %v477
    %v479 = vadd.f32 %v475, %v478
    %vm480 = vweird.f32 %v474
    %vm481 = vweird.f32 %v475
    %vm482 = vmor %vm480, %vm481
    %v483 = vsel %vm482, %v475, %v479
    %v484 = vand.u32 2147483647, %v474
    %vm485 = vcmp.eq.f32.partialorder %v484, 8.507059e+37
    %v486 = vand.u32 %v474, 2147483648
    %v487 = vor.u32 1.1754944e-38, %v486
    %v488 = vsel %vm485, %v487, %v483
    %v489 = vmul.f32 1.0, %v488
    %v490 = vtanh.pop %v470
    %v491 = vmul.f32 %v489, %v435
    %493 = vrot.lane.b32.xlu0 %v490, 64
    %v494 = vpop.permute.xlu0 %493
    %v496 = vmul.f32 %v489, %v494
    %498 = vrot.lane.b32.xlu0 %v496, 32
    %v499 = vpop.permute.xlu0 %498
    %v501 = vadd.f32 %v491, %v499
    %v502 = vtanh.pop %v501
    %504 = vrot.lane.b32.xlu0 %v502, 64
    %v505 = vpop.permute.xlu0 %504
    %v507 = vmul.f32 %v489, %v505
    %509 = vrot.lane.b32.xlu0 %v507, 32
    %v510 = vpop.permute.xlu0 %509
    %s512 = scalar_lea.vmem [#allocation2], 32
    %513 = vst.msk [vmem:[%s512] sm:$0xff] %vm179, %v510
    %v514 = vsel %vm179, %v510, 0
    %516 = vmatpush.msra.mxu0 0.0
    %517 = vmatpush.msra.mxu0 0.0
    %518 = vmatpush.msra.mxu0 0.0
    %519 = vmatpush.msra.mxu0 0.0
    %520 = vmatpush.msra.mxu0 0.0
    %521 = vmatpush.msra.mxu0 0.0
    %522 = vmatpush.msra.mxu0 0.0
    %523 = vmatpush.msra.mxu0 0.0
    %524 = vmatpush.msra.mxu0 0.0
    %525 = vmatpush.msra.mxu0 0.0
    %526 = vmatpush.msra.mxu0 0.0
    %527 = vmatpush.msra.mxu0 0.0
    %528 = vmatpush.msra.mxu0 %v102
    %529 = vmatpush.msra.mxu0 %v101
    %530 = vmatpush.msra.mxu0 %v100
    %531 = vmatpush.msra.mxu0 %v99
    %532 = vmatmul.f32.gmra.mxu0 %v514
    %v533 = vpop.f32.mrf.mxu0
    %v534 = vadd.f32 0.0, %v533
    %535 = vdwg.mxu0
    %v536 = vadd.f32 %v169, %v534
    %v537 = vxor.u32 %v536, 2147483648
    %v538 = vmul.f32 %v537, 1.442695
    %v539 = vpow.pop %v538
    %v540 = vadd.f32 %v539, 1.0
    %v541 = vrcp.pop %v540
    %v542 = vmul.f32 %v540, %v541
    %v543 = vsub.f32 1.0, %v542
    %v544 = vmul.f32 %v541, %v543
    %v545 = vadd.f32 %v541, %v544
    %vm546 = vweird.f32 %v540
    %vm547 = vweird.f32 %v541
    %vm548 = vmor %vm546, %vm547
    %v549 = vsel %vm548, %v541, %v545
    %v550 = vand.u32 2147483647, %v540
    %vm551 = vcmp.eq.f32.partialorder %v550, 8.507059e+37
    %v552 = vand.u32 %v540, 2147483648
    %v553 = vor.u32 1.1754944e-38, %v552
    %v554 = vsel %vm551, %v553, %v549
    %v555 = vmul.f32 1.0, %v554
    %v556 = vtanh.pop %v536
    %v557 = vmul.f32 %v555, %v501
    %559 = vrot.lane.b32.xlu0 %v556, 64
    %v560 = vpop.permute.xlu0 %559
    %v562 = vmul.f32 %v555, %v560
    %564 = vrot.lane.b32.xlu0 %v562, 32
    %v565 = vpop.permute.xlu0 %564
    %v567 = vadd.f32 %v557, %v565
    %v568 = vtanh.pop %v567
    %570 = vrot.lane.b32.xlu0 %v568, 64
    %v571 = vpop.permute.xlu0 %570
    %v573 = vmul.f32 %v555, %v571
    %575 = vrot.lane.b32.xlu0 %v573, 32
    %v576 = vpop.permute.xlu0 %575
    %s578 = scalar_lea.vmem [#allocation2], 40
    %579 = vst.msk [vmem:[%s578] sm:$0xff] %vm179, %v576
    %v580 = vsel %vm179, %v576, 0
    %582 = vmatpush.msra.mxu0 0.0
    %583 = vmatpush.msra.mxu0 0.0
    %584 = vmatpush.msra.mxu0 0.0
    %585 = vmatpush.msra.mxu0 0.0
    %586 = vmatpush.msra.mxu0 0.0
    %587 = vmatpush.msra.mxu0 0.0
    %588 = vmatpush.msra.mxu0 0.0
    %589 = vmatpush.msra.mxu0 0.0
    %590 = vmatpush.msra.mxu0 0.0
    %591 = vmatpush.msra.mxu0 0.0
    %592 = vmatpush.msra.mxu0 0.0
    %593 = vmatpush.msra.mxu0 0.0
    %594 = vmatpush.msra.mxu0 %v102
    %595 = vmatpush.msra.mxu0 %v101
    %596 = vmatpush.msra.mxu0 %v100
    %597 = vmatpush.msra.mxu0 %v99
    %598 = vmatmul.f32.gmra.mxu0 %v580
    %v599 = vpop.f32.mrf.mxu0
    %v600 = vadd.f32 0.0, %v599
    %601 = vdwg.mxu0
    %v602 = vadd.f32 %v172, %v600
    %v603 = vxor.u32 %v602, 2147483648
    %v604 = vmul.f32 %v603, 1.442695
    %v605 = vpow.pop %v604
    %v606 = vadd.f32 %v605, 1.0
    %v607 = vrcp.pop %v606
    %v608 = vmul.f32 %v606, %v607
    %v609 = vsub.f32 1.0, %v608
    %v610 = vmul.f32 %v607, %v609
    %v611 = vadd.f32 %v607, %v610
    %vm612 = vweird.f32 %v606
    %vm613 = vweird.f32 %v607
    %vm614 = vmor %vm612, %vm613
    %v615 = vsel %vm614, %v607, %v611
    %v616 = vand.u32 2147483647, %v606
    %vm617 = vcmp.eq.f32.partialorder %v616, 8.507059e+37
    %v618 = vand.u32 %v606, 2147483648
    %v619 = vor.u32 1.1754944e-38, %v618
    %v620 = vsel %vm617, %v619, %v615
    %v621 = vmul.f32 1.0, %v620
    %v622 = vtanh.pop %v602
    %v623 = vmul.f32 %v621, %v567
    %625 = vrot.lane.b32.xlu0 %v622, 64
    %v626 = vpop.permute.xlu0 %625
    %v628 = vmul.f32 %v621, %v626
    %630 = vrot.lane.b32.xlu0 %v628, 32
    %v631 = vpop.permute.xlu0 %630
    %v633 = vadd.f32 %v623, %v631
    %v634 = vtanh.pop %v633
    %636 = vrot.lane.b32.xlu0 %v634, 64
    %v637 = vpop.permute.xlu0 %636
    %v639 = vmul.f32 %v621, %v637
    %641 = vrot.lane.b32.xlu0 %v639, 32
    %v642 = vpop.permute.xlu0 %641
    %s644 = scalar_lea.vmem [#allocation2], 48
    %645 = vst.msk [vmem:[%s644] sm:$0xff] %vm179, %v642
    %v646 = vsel %vm179, %v642, 0
    %648 = vmatpush.msra.mxu0 0.0
    %649 = vmatpush.msra.mxu0 0.0
    %650 = vmatpush.msra.mxu0 0.0
    %651 = vmatpush.msra.mxu0 0.0
    %652 = vmatpush.msra.mxu0 0.0
    %653 = vmatpush.msra.mxu0 0.0
    %654 = vmatpush.msra.mxu0 0.0
    %655 = vmatpush.msra.mxu0 0.0
    %656 = vmatpush.msra.mxu0 0.0
    %657 = vmatpush.msra.mxu0 0.0
    %658 = vmatpush.msra.mxu0 0.0
    %659 = vmatpush.msra.mxu0 0.0
    %660 = vmatpush.msra.mxu0 %v102
    %661 = vmatpush.msra.mxu0 %v101
    %662 = vmatpush.msra.mxu0 %v100
    %663 = vmatpush.msra.mxu0 %v99
    %664 = vmatmul.f32.gmra.mxu0 %v646
    %v665 = vpop.f32.mrf.mxu0
    %v666 = vadd.f32 0.0, %v665
    %667 = vdwg.mxu0
    %v668 = vadd.f32 %v175, %v666
    %v669 = vxor.u32 %v668, 2147483648
    %v670 = vmul.f32 %v669, 1.442695
    %v671 = vpow.pop %v670
    %v672 = vadd.f32 %v671, 1.0
    %v673 = vrcp.pop %v672
    %v674 = vmul.f32 %v672, %v673
    %v675 = vsub.f32 1.0, %v674
    %v676 = vmul.f32 %v673, %v675
    %v677 = vadd.f32 %v673, %v676
    %vm678 = vweird.f32 %v672
    %vm679 = vweird.f32 %v673
    %vm680 = vmor %vm678, %vm679
    %v681 = vsel %vm680, %v673, %v677
    %v682 = vand.u32 2147483647, %v672
    %vm683 = vcmp.eq.f32.partialorder %v682, 8.507059e+37
    %v684 = vand.u32 %v672, 2147483648
    %v685 = vor.u32 1.1754944e-38, %v684
    %v686 = vsel %vm683, %v685, %v681
    %v687 = vmul.f32 1.0, %v686
    %v688 = vtanh.pop %v668
    %v689 = vmul.f32 %v687, %v633
    %691 = vrot.lane.b32.xlu0 %v688, 64
    %v692 = vpop.permute.xlu0 %691
    %v694 = vmul.f32 %v687, %v692
    %696 = vrot.lane.b32.xlu0 %v694, 32
    %v697 = vpop.permute.xlu0 %696
    %v699 = vadd.f32 %v689, %v697
    %v700 = vtanh.pop %v699
    %702 = vrot.lane.b32.xlu0 %v700, 64
    %v703 = vpop.permute.xlu0 %702
    %v705 = vmul.f32 %v687, %v703
    %707 = vrot.lane.b32.xlu0 %v705, 32
    %v708 = vpop.permute.xlu0 %707
    %s710 = scalar_lea.vmem [#allocation2], 56
    %711 = vst.msk [vmem:[%s710] sm:$0xff] %vm179, %v708
    %712 = vst.msk [vmem:[#allocation10] sm:$0xff] %vm179, %v708
    %714 = vrot.lane.b32.xlu0 %v699, 96
    %v715 = vpop.permute.xlu0 %714
    %717 = vst.msk [vmem:[#allocation11] sm:$0xff] %vm179, %v715
    %v718 = vld [vmem:[#allocation2] sm:$0xff]
    %v719 = vld [vmem:[#allocation2 + $0x8] sm:$0xff]
    %v720 = vld [vmem:[#allocation2 + $0x10] sm:$0xff]
    %v721 = vld [vmem:[#allocation2 + $0x18] sm:$0xff]
    %v722 = vld [vmem:[#allocation2 + $0x20] sm:$0xff]
    %v723 = vld [vmem:[#allocation2 + $0x28] sm:$0xff]
    %v724 = vld [vmem:[#allocation2 + $0x30] sm:$0xff]
    %v725 = vld [vmem:[#allocation2 + $0x38] sm:$0xff]
    %v726 = vld [vmem:[%s4] sm:$0xff]
    %v727 = vld [vmem:[%s4 + $0x8] sm:$0xff]
    %v728 = vld [vmem:[%s4 + $0x10] sm:$0xff]
    %v729 = vld [vmem:[%s4 + $0x18] sm:$0xff]
    %v730 = vld [vmem:[%s5] sm:$0xff]
    %v731 = vld [vmem:[%s5 + $0x8] sm:$0xff]
    %v732 = vld [vmem:[%s5 + $0x10] sm:$0xff]
    %v733 = vld [vmem:[%s5 + $0x18] sm:$0xff]
    %v734 = vld [vmem:[%s6] sm:$0x1]
    %v736 = vperm.slane %v734, 0
    %v739 = vsel %vm179, %v718, 0
    %v742 = vsel %vm179, %v719, 0
    %v745 = vsel %vm179, %v720, 0
    %v748 = vsel %vm179, %v721, 0
    %v751 = vsel %vm179, %v722, 0
    %v754 = vsel %vm179, %v723, 0
    %v757 = vsel %vm179, %v724, 0
    %v760 = vsel %vm179, %v725, 0
    %762 = vmatpush.msra.mxu0 0.0
    %763 = vmatpush.msra.mxu0 0.0
    %764 = vmatpush.msra.mxu0 0.0
    %765 = vmatpush.msra.mxu0 0.0
    %766 = vmatpush.msra.mxu0 0.0
    %767 = vmatpush.msra.mxu0 0.0
    %768 = vmatpush.msra.mxu0 0.0
    %769 = vmatpush.msra.mxu0 0.0
    %770 = vmatpush.msra.mxu0 0.0
    %771 = vmatpush.msra.mxu0 0.0
    %772 = vmatpush.msra.mxu0 0.0
    %773 = vmatpush.msra.mxu0 0.0
    %774 = vmatpush.msra.mxu0 %v729
    %775 = vmatpush.msra.mxu0 %v728
    %776 = vmatpush.msra.mxu0 %v727
    %777 = vmatpush.msra.mxu0 %v726
    %778 = vmatmul.f32.gmra.mxu0 %v739
    %v779 = vpop.f32.mrf.mxu0
    %v780 = vadd.f32 %v736, %v779
    %781 = vmatmul.f32.gmra.mxu0 %v742
    %v782 = vpop.f32.mrf.mxu0
    %v783 = vadd.f32 %v736, %v782
    %784 = vmatmul.f32.gmra.mxu0 %v745
    %v785 = vpop.f32.mrf.mxu0
    %v786 = vadd.f32 %v736, %v785
    %787 = vmatmul.f32.gmra.mxu0 %v748
    %v788 = vpop.f32.mrf.mxu0
    %v789 = vadd.f32 %v736, %v788
    %790 = vmatmul.f32.gmra.mxu0 %v751
    %v791 = vpop.f32.mrf.mxu0
    %v792 = vadd.f32 %v736, %v791
    %793 = vmatmul.f32.gmra.mxu0 %v754
    %v794 = vpop.f32.mrf.mxu0
    %v795 = vadd.f32 %v736, %v794
    %796 = vmatmul.f32.gmra.mxu0 %v757
    %v797 = vpop.f32.mrf.mxu0
    %v798 = vadd.f32 %v736, %v797
    %799 = vmatmul.f32.gmra.mxu0 %v760
    %v800 = vpop.f32.mrf.mxu0
    %v801 = vadd.f32 %v736, %v800
    %802 = vdwg.mxu0
    %s803 = scalar_lea.vmem [#allocation7], 8
    %v804 = vld [vmem:[%s803] sm:$0xff]
    %s805 = scalar_lea.vmem [#allocation9], 8
    %v806 = vld [vmem:[%s805] sm:$0xff]
    %v808 = vsel %vm179, %v804, 0
    %810 = vmatpush.msra.mxu0 0.0
    %811 = vmatpush.msra.mxu0 0.0
    %812 = vmatpush.msra.mxu0 0.0
    %813 = vmatpush.msra.mxu0 0.0
    %814 = vmatpush.msra.mxu0 0.0
    %815 = vmatpush.msra.mxu0 0.0
    %816 = vmatpush.msra.mxu0 0.0
    %817 = vmatpush.msra.mxu0 0.0
    %818 = vmatpush.msra.mxu0 0.0
    %819 = vmatpush.msra.mxu0 0.0
    %820 = vmatpush.msra.mxu0 0.0
    %821 = vmatpush.msra.mxu0 0.0
    %822 = vmatpush.msra.mxu0 %v733
    %823 = vmatpush.msra.mxu0 %v732
    %824 = vmatpush.msra.mxu0 %v731
    %825 = vmatpush.msra.mxu0 %v730
    %826 = vmatmul.f32.gmra.mxu0 %v808
    %v827 = vpop.f32.mrf.mxu0
    %v828 = vadd.f32 0.0, %v827
    %829 = vdwg.mxu0
    %v830 = vadd.f32 %v780, %v828
    %v831 = vxor.u32 %v830, 2147483648
    %v832 = vmul.f32 %v831, 1.442695
    %v833 = vpow.pop %v832
    %v834 = vadd.f32 %v833, 1.0
    %v835 = vrcp.pop %v834
    %v836 = vmul.f32 %v834, %v835
    %v837 = vsub.f32 1.0, %v836
    %v838 = vmul.f32 %v835, %v837
    %v839 = vadd.f32 %v835, %v838
    %vm840 = vweird.f32 %v834
    %vm841 = vweird.f32 %v835
    %vm842 = vmor %vm840, %vm841
    %v843 = vsel %vm842, %v835, %v839
    %v844 = vand.u32 2147483647, %v834
    %vm845 = vcmp.eq.f32.partialorder %v844, 8.507059e+37
    %v846 = vand.u32 %v834, 2147483648
    %v847 = vor.u32 1.1754944e-38, %v846
    %v848 = vsel %vm845, %v847, %v843
    %v849 = vmul.f32 1.0, %v848
    %v850 = vtanh.pop %v830
    %852 = vrot.lane.b32.xlu0 %v806, 32
    %v853 = vpop.permute.xlu0 %852
    %v855 = vmul.f32 %v849, %v853
    %857 = vrot.lane.b32.xlu0 %v850, 64
    %v858 = vpop.permute.xlu0 %857
    %v860 = vmul.f32 %v849, %v858
    %862 = vrot.lane.b32.xlu0 %v860, 32
    %v863 = vpop.permute.xlu0 %862
    %v865 = vadd.f32 %v855, %v863
    %v866 = vtanh.pop %v865
    %868 = vrot.lane.b32.xlu0 %v866, 64
    %v869 = vpop.permute.xlu0 %868
    %v871 = vmul.f32 %v849, %v869
    %873 = vrot.lane.b32.xlu0 %v871, 32
    %v874 = vpop.permute.xlu0 %873
    %876 = vst.msk [vmem:[#allocation2] sm:$0xff] %vm179, %v874
    %v877 = vsel %vm179, %v874, 0
    %879 = vmatpush.msra.mxu0 0.0
    %880 = vmatpush.msra.mxu0 0.0
    %881 = vmatpush.msra.mxu0 0.0
    %882 = vmatpush.msra.mxu0 0.0
    %883 = vmatpush.msra.mxu0 0.0
    %884 = vmatpush.msra.mxu0 0.0
    %885 = vmatpush.msra.mxu0 0.0
    %886 = vmatpush.msra.mxu0 0.0
    %887 = vmatpush.msra.mxu0 0.0
    %888 = vmatpush.msra.mxu0 0.0
    %889 = vmatpush.msra.mxu0 0.0
    %890 = vmatpush.msra.mxu0 0.0
    %891 = vmatpush.msra.mxu0 %v733
    %892 = vmatpush.msra.mxu0 %v732
    %893 = vmatpush.msra.mxu0 %v731
    %894 = vmatpush.msra.mxu0 %v730
    %895 = vmatmul.f32.gmra.mxu0 %v877
    %v896 = vpop.f32.mrf.mxu0
    %v897 = vadd.f32 0.0, %v896
    %898 = vdwg.mxu0
    %v899 = vadd.f32 %v783, %v897
    %v900 = vxor.u32 %v899, 2147483648
    %v901 = vmul.f32 %v900, 1.442695
    %v902 = vpow.pop %v901
    %v903 = vadd.f32 %v902, 1.0
    %v904 = vrcp.pop %v903
    %v905 = vmul.f32 %v903, %v904
    %v906 = vsub.f32 1.0, %v905
    %v907 = vmul.f32 %v904, %v906
    %v908 = vadd.f32 %v904, %v907
    %vm909 = vweird.f32 %v903
    %vm910 = vweird.f32 %v904
    %vm911 = vmor %vm909, %vm910
    %v912 = vsel %vm911, %v904, %v908
    %v913 = vand.u32 2147483647, %v903
    %vm914 = vcmp.eq.f32.partialorder %v913, 8.507059e+37
    %v915 = vand.u32 %v903, 2147483648
    %v916 = vor.u32 1.1754944e-38, %v915
    %v917 = vsel %vm914, %v916, %v912
    %v918 = vmul.f32 1.0, %v917
    %v919 = vtanh.pop %v899
    %v920 = vmul.f32 %v918, %v865
    %922 = vrot.lane.b32.xlu0 %v919, 64
    %v923 = vpop.permute.xlu0 %922
    %v925 = vmul.f32 %v918, %v923
    %927 = vrot.lane.b32.xlu0 %v925, 32
    %v928 = vpop.permute.xlu0 %927
    %v930 = vadd.f32 %v920, %v928
    %v931 = vtanh.pop %v930
    %933 = vrot.lane.b32.xlu0 %v931, 64
    %v934 = vpop.permute.xlu0 %933
    %v936 = vmul.f32 %v918, %v934
    %938 = vrot.lane.b32.xlu0 %v936, 32
    %v939 = vpop.permute.xlu0 %938
    %941 = vst.msk [vmem:[%s314] sm:$0xff] %vm179, %v939
    %v942 = vsel %vm179, %v939, 0
    %944 = vmatpush.msra.mxu0 0.0
    %945 = vmatpush.msra.mxu0 0.0
    %946 = vmatpush.msra.mxu0 0.0
    %947 = vmatpush.msra.mxu0 0.0
    %948 = vmatpush.msra.mxu0 0.0
    %949 = vmatpush.msra.mxu0 0.0
    %950 = vmatpush.msra.mxu0 0.0
    %951 = vmatpush.msra.mxu0 0.0
    %952 = vmatpush.msra.mxu0 0.0
    %953 = vmatpush.msra.mxu0 0.0
    %954 = vmatpush.msra.mxu0 0.0
    %955 = vmatpush.msra.mxu0 0.0
    %956 = vmatpush.msra.mxu0 %v733
    %957 = vmatpush.msra.mxu0 %v732
    %958 = vmatpush.msra.mxu0 %v731
    %959 = vmatpush.msra.mxu0 %v730
    %960 = vmatmul.f32.gmra.mxu0 %v942
    %v961 = vpop.f32.mrf.mxu0
    %v962 = vadd.f32 0.0, %v961
    %963 = vdwg.mxu0
    %v964 = vadd.f32 %v786, %v962
    %v965 = vxor.u32 %v964, 2147483648
    %v966 = vmul.f32 %v965, 1.442695
    %v967 = vpow.pop %v966
    %v968 = vadd.f32 %v967, 1.0
    %v969 = vrcp.pop %v968
    %v970 = vmul.f32 %v968, %v969
    %v971 = vsub.f32 1.0, %v970
    %v972 = vmul.f32 %v969, %v971
    %v973 = vadd.f32 %v969, %v972
    %vm974 = vweird.f32 %v968
    %vm975 = vweird.f32 %v969
    %vm976 = vmor %vm974, %vm975
    %v977 = vsel %vm976, %v969, %v973
    %v978 = vand.u32 2147483647, %v968
    %vm979 = vcmp.eq.f32.partialorder %v978, 8.507059e+37
    %v980 = vand.u32 %v968, 2147483648
    %v981 = vor.u32 1.1754944e-38, %v980
    %v982 = vsel %vm979, %v981, %v977
    %v983 = vmul.f32 1.0, %v982
    %v984 = vtanh.pop %v964
    %v985 = vmul.f32 %v983, %v930
    %987 = vrot.lane.b32.xlu0 %v984, 64
    %v988 = vpop.permute.xlu0 %987
    %v990 = vmul.f32 %v983, %v988
    %992 = vrot.lane.b32.xlu0 %v990, 32
    %v993 = vpop.permute.xlu0 %992
    %v995 = vadd.f32 %v985, %v993
    %v996 = vtanh.pop %v995
    %998 = vrot.lane.b32.xlu0 %v996, 64
    %v999 = vpop.permute.xlu0 %998
    %v1001 = vmul.f32 %v983, %v999
    %1003 = vrot.lane.b32.xlu0 %v1001, 32
    %v1004 = vpop.permute.xlu0 %1003
    %1006 = vst.msk [vmem:[%s380] sm:$0xff] %vm179, %v1004
    %v1007 = vsel %vm179, %v1004, 0
    %1009 = vmatpush.msra.mxu0 0.0
    %1010 = vmatpush.msra.mxu0 0.0
    %1011 = vmatpush.msra.mxu0 0.0
    %1012 = vmatpush.msra.mxu0 0.0
    %1013 = vmatpush.msra.mxu0 0.0
    %1014 = vmatpush.msra.mxu0 0.0
    %1015 = vmatpush.msra.mxu0 0.0
    %1016 = vmatpush.msra.mxu0 0.0
    %1017 = vmatpush.msra.mxu0 0.0
    %1018 = vmatpush.msra.mxu0 0.0
    %1019 = vmatpush.msra.mxu0 0.0
    %1020 = vmatpush.msra.mxu0 0.0
    %1021 = vmatpush.msra.mxu0 %v733
    %1022 = vmatpush.msra.mxu0 %v732
    %1023 = vmatpush.msra.mxu0 %v731
    %1024 = vmatpush.msra.mxu0 %v730
    %1025 = vmatmul.f32.gmra.mxu0 %v1007
    %v1026 = vpop.f32.mrf.mxu0
    %v1027 = vadd.f32 0.0, %v1026
    %1028 = vdwg.mxu0
    %v1029 = vadd.f32 %v789, %v1027
    %v1030 = vxor.u32 %v1029, 2147483648
    %v1031 = vmul.f32 %v1030, 1.442695
    %v1032 = vpow.pop %v1031
    %v1033 = vadd.f32 %v1032, 1.0
    %v1034 = vrcp.pop %v1033
    %v1035 = vmul.f32 %v1033, %v1034
    %v1036 = vsub.f32 1.0, %v1035
    %v1037 = vmul.f32 %v1034, %v1036
    %v1038 = vadd.f32 %v1034, %v1037
    %vm1039 = vweird.f32 %v1033
    %vm1040 = vweird.f32 %v1034
    %vm1041 = vmor %vm1039, %vm1040
    %v1042 = vsel %vm1041, %v1034, %v1038
    %v1043 = vand.u32 2147483647, %v1033
    %vm1044 = vcmp.eq.f32.partialorder %v1043, 8.507059e+37
    %v1045 = vand.u32 %v1033, 2147483648
    %v1046 = vor.u32 1.1754944e-38, %v1045
    %v1047 = vsel %vm1044, %v1046, %v1042
    %v1048 = vmul.f32 1.0, %v1047
    %v1049 = vtanh.pop %v1029
    %v1050 = vmul.f32 %v1048, %v995
    %1052 = vrot.lane.b32.xlu0 %v1049, 64
    %v1053 = vpop.permute.xlu0 %1052
    %v1055 = vmul.f32 %v1048, %v1053
    %1057 = vrot.lane.b32.xlu0 %v1055, 32
    %v1058 = vpop.permute.xlu0 %1057
    %v1060 = vadd.f32 %v1050, %v1058
    %v1061 = vtanh.pop %v1060
    %1063 = vrot.lane.b32.xlu0 %v1061, 64
    %v1064 = vpop.permute.xlu0 %1063
    %v1066 = vmul.f32 %v1048, %v1064
    %1068 = vrot.lane.b32.xlu0 %v1066, 32
    %v1069 = vpop.permute.xlu0 %1068
    %1071 = vst.msk [vmem:[%s446] sm:$0xff] %vm179, %v1069
    %v1072 = vsel %vm179, %v1069, 0
    %1074 = vmatpush.msra.mxu0 0.0
    %1075 = vmatpush.msra.mxu0 0.0
    %1076 = vmatpush.msra.mxu0 0.0
    %1077 = vmatpush.msra.mxu0 0.0
    %1078 = vmatpush.msra.mxu0 0.0
    %1079 = vmatpush.msra.mxu0 0.0
    %1080 = vmatpush.msra.mxu0 0.0
    %1081 = vmatpush.msra.mxu0 0.0
    %1082 = vmatpush.msra.mxu0 0.0
    %1083 = vmatpush.msra.mxu0 0.0
    %1084 = vmatpush.msra.mxu0 0.0
    %1085 = vmatpush.msra.mxu0 0.0
    %1086 = vmatpush.msra.mxu0 %v733
    %1087 = vmatpush.msra.mxu0 %v732
    %1088 = vmatpush.msra.mxu0 %v731
    %1089 = vmatpush.msra.mxu0 %v730
    %1090 = vmatmul.f32.gmra.mxu0 %v1072
    %v1091 = vpop.f32.mrf.mxu0
    %v1092 = vadd.f32 0.0, %v1091
    %1093 = vdwg.mxu0
    %v1094 = vadd.f32 %v792, %v1092
    %v1095 = vxor.u32 %v1094, 2147483648
    %v1096 = vmul.f32 %v1095, 1.442695
    %v1097 = vpow.pop %v1096
    %v1098 = vadd.f32 %v1097, 1.0
    %v1099 = vrcp.pop %v1098
    %v1100 = vmul.f32 %v1098, %v1099
    %v1101 = vsub.f32 1.0, %v1100
    %v1102 = vmul.f32 %v1099, %v1101
    %v1103 = vadd.f32 %v1099, %v1102
    %vm1104 = vweird.f32 %v1098
    %vm1105 = vweird.f32 %v1099
    %vm1106 = vmor %vm1104, %vm1105
    %v1107 = vsel %vm1106, %v1099, %v1103
    %v1108 = vand.u32 2147483647, %v1098
    %vm1109 = vcmp.eq.f32.partialorder %v1108, 8.507059e+37
    %v1110 = vand.u32 %v1098, 2147483648
    %v1111 = vor.u32 1.1754944e-38, %v1110
    %v1112 = vsel %vm1109, %v1111, %v1107
    %v1113 = vmul.f32 1.0, %v1112
    %v1114 = vtanh.pop %v1094
    %v1115 = vmul.f32 %v1113, %v1060
    %1117 = vrot.lane.b32.xlu0 %v1114, 64
    %v1118 = vpop.permute.xlu0 %1117
    %v1120 = vmul.f32 %v1113, %v1118
    %1122 = vrot.lane.b32.xlu0 %v1120, 32
    %v1123 = vpop.permute.xlu0 %1122
    %v1125 = vadd.f32 %v1115, %v1123
    %v1126 = vtanh.pop %v1125
    %1128 = vrot.lane.b32.xlu0 %v1126, 64
    %v1129 = vpop.permute.xlu0 %1128
    %v1131 = vmul.f32 %v1113, %v1129
    %1133 = vrot.lane.b32.xlu0 %v1131, 32
    %v1134 = vpop.permute.xlu0 %1133
    %1136 = vst.msk [vmem:[%s512] sm:$0xff] %vm179, %v1134
    %v1137 = vsel %vm179, %v1134, 0
    %1139 = vmatpush.msra.mxu0 0.0
    %1140 = vmatpush.msra.mxu0 0.0
    %1141 = vmatpush.msra.mxu0 0.0
    %1142 = vmatpush.msra.mxu0 0.0
    %1143 = vmatpush.msra.mxu0 0.0
    %1144 = vmatpush.msra.mxu0 0.0
    %1145 = vmatpush.msra.mxu0 0.0
    %1146 = vmatpush.msra.mxu0 0.0
    %1147 = vmatpush.msra.mxu0 0.0
    %1148 = vmatpush.msra.mxu0 0.0
    %1149 = vmatpush.msra.mxu0 0.0
    %1150 = vmatpush.msra.mxu0 0.0
    %1151 = vmatpush.msra.mxu0 %v733
    %1152 = vmatpush.msra.mxu0 %v732
    %1153 = vmatpush.msra.mxu0 %v731
    %1154 = vmatpush.msra.mxu0 %v730
    %1155 = vmatmul.f32.gmra.mxu0 %v1137
    %v1156 = vpop.f32.mrf.mxu0
    %v1157 = vadd.f32 0.0, %v1156
    %1158 = vdwg.mxu0
    %v1159 = vadd.f32 %v795, %v1157
    %v1160 = vxor.u32 %v1159, 2147483648
    %v1161 = vmul.f32 %v1160, 1.442695
    %v1162 = vpow.pop %v1161
    %v1163 = vadd.f32 %v1162, 1.0
    %v1164 = vrcp.pop %v1163
    %v1165 = vmul.f32 %v1163, %v1164
    %v1166 = vsub.f32 1.0, %v1165
    %v1167 = vmul.f32 %v1164, %v1166
    %v1168 = vadd.f32 %v1164, %v1167
    %vm1169 = vweird.f32 %v1163
    %vm1170 = vweird.f32 %v1164
    %vm1171 = vmor %vm1169, %vm1170
    %v1172 = vsel %vm1171, %v1164, %v1168
    %v1173 = vand.u32 2147483647, %v1163
    %vm1174 = vcmp.eq.f32.partialorder %v1173, 8.507059e+37
    %v1175 = vand.u32 %v1163, 2147483648
    %v1176 = vor.u32 1.1754944e-38, %v1175
    %v1177 = vsel %vm1174, %v1176, %v1172
    %v1178 = vmul.f32 1.0, %v1177
    %v1179 = vtanh.pop %v1159
    %v1180 = vmul.f32 %v1178, %v1125
    %1182 = vrot.lane.b32.xlu0 %v1179, 64
    %v1183 = vpop.permute.xlu0 %1182
    %v1185 = vmul.f32 %v1178, %v1183
    %1187 = vrot.lane.b32.xlu0 %v1185, 32
    %v1188 = vpop.permute.xlu0 %1187
    %v1190 = vadd.f32 %v1180, %v1188
    %v1191 = vtanh.pop %v1190
    %1193 = vrot.lane.b32.xlu0 %v1191, 64
    %v1194 = vpop.permute.xlu0 %1193
    %v1196 = vmul.f32 %v1178, %v1194
    %1198 = vrot.lane.b32.xlu0 %v1196, 32
    %v1199 = vpop.permute.xlu0 %1198
    %1201 = vst.msk [vmem:[%s578] sm:$0xff] %vm179, %v1199
    %v1202 = vsel %vm179, %v1199, 0
    %1204 = vmatpush.msra.mxu0 0.0
    %1205 = vmatpush.msra.mxu0 0.0
    %1206 = vmatpush.msra.mxu0 0.0
    %1207 = vmatpush.msra.mxu0 0.0
    %1208 = vmatpush.msra.mxu0 0.0
    %1209 = vmatpush.msra.mxu0 0.0
    %1210 = vmatpush.msra.mxu0 0.0
    %1211 = vmatpush.msra.mxu0 0.0
    %1212 = vmatpush.msra.mxu0 0.0
    %1213 = vmatpush.msra.mxu0 0.0
    %1214 = vmatpush.msra.mxu0 0.0
    %1215 = vmatpush.msra.mxu0 0.0
    %1216 = vmatpush.msra.mxu0 %v733
    %1217 = vmatpush.msra.mxu0 %v732
    %1218 = vmatpush.msra.mxu0 %v731
    %1219 = vmatpush.msra.mxu0 %v730
    %1220 = vmatmul.f32.gmra.mxu0 %v1202
    %v1221 = vpop.f32.mrf.mxu0
    %v1222 = vadd.f32 0.0, %v1221
    %1223 = vdwg.mxu0
    %v1224 = vadd.f32 %v798, %v1222
    %v1225 = vxor.u32 %v1224, 2147483648
    %v1226 = vmul.f32 %v1225, 1.442695
    %v1227 = vpow.pop %v1226
    %v1228 = vadd.f32 %v1227, 1.0
    %v1229 = vrcp.pop %v1228
    %v1230 = vmul.f32 %v1228, %v1229
    %v1231 = vsub.f32 1.0, %v1230
    %v1232 = vmul.f32 %v1229, %v1231
    %v1233 = vadd.f32 %v1229, %v1232
    %vm1234 = vweird.f32 %v1228
    %vm1235 = vweird.f32 %v1229
    %vm1236 = vmor %vm1234, %vm1235
    %v1237 = vsel %vm1236, %v1229, %v1233
    %v1238 = vand.u32 2147483647, %v1228
    %vm1239 = vcmp.eq.f32.partialorder %v1238, 8.507059e+37
    %v1240 = vand.u32 %v1228, 2147483648
    %v1241 = vor.u32 1.1754944e-38, %v1240
    %v1242 = vsel %vm1239, %v1241, %v1237
    %v1243 = vmul.f32 1.0, %v1242
    %v1244 = vtanh.pop %v1224
    %v1245 = vmul.f32 %v1243, %v1190
    %1247 = vrot.lane.b32.xlu0 %v1244, 64
    %v1248 = vpop.permute.xlu0 %1247
    %v1250 = vmul.f32 %v1243, %v1248
    %1252 = vrot.lane.b32.xlu0 %v1250, 32
    %v1253 = vpop.permute.xlu0 %1252
    %v1255 = vadd.f32 %v1245, %v1253
    %v1256 = vtanh.pop %v1255
    %1258 = vrot.lane.b32.xlu0 %v1256, 64
    %v1259 = vpop.permute.xlu0 %1258
    %v1261 = vmul.f32 %v1243, %v1259
    %1263 = vrot.lane.b32.xlu0 %v1261, 32
    %v1264 = vpop.permute.xlu0 %1263
    %1266 = vst.msk [vmem:[%s644] sm:$0xff] %vm179, %v1264
    %v1267 = vsel %vm179, %v1264, 0
    %1269 = vmatpush.msra.mxu0 0.0
    %1270 = vmatpush.msra.mxu0 0.0
    %1271 = vmatpush.msra.mxu0 0.0
    %1272 = vmatpush.msra.mxu0 0.0
    %1273 = vmatpush.msra.mxu0 0.0
    %1274 = vmatpush.msra.mxu0 0.0
    %1275 = vmatpush.msra.mxu0 0.0
    %1276 = vmatpush.msra.mxu0 0.0
    %1277 = vmatpush.msra.mxu0 0.0
    %1278 = vmatpush.msra.mxu0 0.0
    %1279 = vmatpush.msra.mxu0 0.0
    %1280 = vmatpush.msra.mxu0 0.0
    %1281 = vmatpush.msra.mxu0 %v733
    %1282 = vmatpush.msra.mxu0 %v732
    %1283 = vmatpush.msra.mxu0 %v731
    %1284 = vmatpush.msra.mxu0 %v730
    %1285 = vmatmul.f32.gmra.mxu0 %v1267
    %v1286 = vpop.f32.mrf.mxu0
    %v1287 = vadd.f32 0.0, %v1286
    %1288 = vdwg.mxu0
    %v1289 = vadd.f32 %v801, %v1287
    %v1290 = vxor.u32 %v1289, 2147483648
    %v1291 = vmul.f32 %v1290, 1.442695
    %v1292 = vpow.pop %v1291
    %v1293 = vadd.f32 %v1292, 1.0
    %v1294 = vrcp.pop %v1293
    %v1295 = vmul.f32 %v1293, %v1294
    %v1296 = vsub.f32 1.0, %v1295
    %v1297 = vmul.f32 %v1294, %v1296
    %v1298 = vadd.f32 %v1294, %v1297
    %vm1299 = vweird.f32 %v1293
    %vm1300 = vweird.f32 %v1294
    %vm1301 = vmor %vm1299, %vm1300
    %v1302 = vsel %vm1301, %v1294, %v1298
    %v1303 = vand.u32 2147483647, %v1293
    %vm1304 = vcmp.eq.f32.partialorder %v1303, 8.507059e+37
    %v1305 = vand.u32 %v1293, 2147483648
    %v1306 = vor.u32 1.1754944e-38, %v1305
    %v1307 = vsel %vm1304, %v1306, %v1302
    %v1308 = vmul.f32 1.0, %v1307
    %v1309 = vtanh.pop %v1289
    %v1310 = vmul.f32 %v1308, %v1255
    %1312 = vrot.lane.b32.xlu0 %v1309, 64
    %v1313 = vpop.permute.xlu0 %1312
    %v1315 = vmul.f32 %v1308, %v1313
    %1317 = vrot.lane.b32.xlu0 %v1315, 32
    %v1318 = vpop.permute.xlu0 %1317
    %v1320 = vadd.f32 %v1310, %v1318
    %v1321 = vtanh.pop %v1320
    %1323 = vrot.lane.b32.xlu0 %v1321, 64
    %v1324 = vpop.permute.xlu0 %1323
    %v1326 = vmul.f32 %v1308, %v1324
    %1328 = vrot.lane.b32.xlu0 %v1326, 32
    %v1329 = vpop.permute.xlu0 %1328
    %1331 = vst.msk [vmem:[%s710] sm:$0xff] %vm179, %v1329
    %s1332 = scalar_lea.vmem [#allocation10], 8
    %1333 = vst.msk [vmem:[%s1332] sm:$0xff] %vm179, %v1329
    %1335 = vrot.lane.b32.xlu0 %v1320, 96
    %v1336 = vpop.permute.xlu0 %1335
    %s1338 = scalar_lea.vmem [#allocation11], 8
    %1339 = vst.msk [vmem:[%s1338] sm:$0xff] %vm179, %v1336
    %v1340 = vld [vmem:[#allocation2] sm:$0xff]
    %v1341 = vld [vmem:[#allocation2 + $0x8] sm:$0xff]
    %v1342 = vld [vmem:[#allocation2 + $0x10] sm:$0xff]
    %v1343 = vld [vmem:[#allocation2 + $0x18] sm:$0xff]
    %v1344 = vld [vmem:[#allocation2 + $0x20] sm:$0xff]
    %v1345 = vld [vmem:[#allocation2 + $0x28] sm:$0xff]
    %v1346 = vld [vmem:[#allocation2 + $0x30] sm:$0xff]
    %v1347 = vld [vmem:[#allocation2 + $0x38] sm:$0xff]
    %v1348 = vld [vmem:[%s9] sm:$0xff]
    %v1349 = vld [vmem:[%s9 + $0x8] sm:$0xff]
    %v1350 = vld [vmem:[%s9 + $0x10] sm:$0xff]
    %v1351 = vld [vmem:[%s9 + $0x18] sm:$0xff]
    %v1352 = vld [vmem:[#allocation3] sm:$0x1]
    %v1354 = vperm.slane %v1352, 0
    %v1357 = vsel %vm179, %v1340, 0
    %v1360 = vsel %vm179, %v1341, 0
    %v1363 = vsel %vm179, %v1342, 0
    %v1366 = vsel %vm179, %v1343, 0
    %v1369 = vsel %vm179, %v1344, 0
    %v1372 = vsel %vm179, %v1345, 0
    %v1375 = vsel %vm179, %v1346, 0
    %v1378 = vsel %vm179, %v1347, 0
    %1380 = vmatpush.msra.mxu0 0.0
    %1381 = vmatpush.msra.mxu0 0.0
    %1382 = vmatpush.msra.mxu0 0.0
    %1383 = vmatpush.msra.mxu0 0.0
    %1384 = vmatpush.msra.mxu0 0.0
    %1385 = vmatpush.msra.mxu0 0.0
    %1386 = vmatpush.msra.mxu0 0.0
    %1387 = vmatpush.msra.mxu0 0.0
    %1388 = vmatpush.msra.mxu0 0.0
    %1389 = vmatpush.msra.mxu0 0.0
    %1390 = vmatpush.msra.mxu0 0.0
    %1391 = vmatpush.msra.mxu0 0.0
    %1392 = vmatpush.msra.mxu0 %v1351
    %1393 = vmatpush.msra.mxu0 %v1350
    %1394 = vmatpush.msra.mxu0 %v1349
    %1395 = vmatpush.msra.mxu0 %v1348
    %1396 = vmatmul.f32.gmra.mxu0 %v1357
    %v1397 = vpop.f32.mrf.mxu0
    %v1398 = vadd.f32 %v1354, %v1397
    %1399 = vmatmul.f32.gmra.mxu0 %v1360
    %v1400 = vpop.f32.mrf.mxu0
    %v1401 = vadd.f32 %v1354, %v1400
    %1402 = vmatmul.f32.gmra.mxu0 %v1363
    %v1403 = vpop.f32.mrf.mxu0
    %v1404 = vadd.f32 %v1354, %v1403
    %1405 = vmatmul.f32.gmra.mxu0 %v1366
    %v1406 = vpop.f32.mrf.mxu0
    %v1407 = vadd.f32 %v1354, %v1406
    %1408 = vmatmul.f32.gmra.mxu0 %v1369
    %v1409 = vpop.f32.mrf.mxu0
    %v1410 = vadd.f32 %v1354, %v1409
    %1411 = vmatmul.f32.gmra.mxu0 %v1372
    %v1412 = vpop.f32.mrf.mxu0
    %v1413 = vadd.f32 %v1354, %v1412
    %1414 = vmatmul.f32.gmra.mxu0 %v1375
    %v1415 = vpop.f32.mrf.mxu0
    %v1416 = vadd.f32 %v1354, %v1415
    %1417 = vmatmul.f32.gmra.mxu0 %v1378
    %v1418 = vpop.f32.mrf.mxu0
    %v1419 = vadd.f32 %v1354, %v1418
    %1420 = vdwg.mxu0
    %vm1421 = vcmask 7168
    %1422 = vst.msk [vmem:[%s11] sm:$0xff] %vm1421, %v1398
    %1423 = vst.msk [vmem:[%s11 + $0x8] sm:$0xff] %vm1421, %v1401
    %1424 = vst.msk [vmem:[%s11 + $0x10] sm:$0xff] %vm1421, %v1404
    %1425 = vst.msk [vmem:[%s11 + $0x18] sm:$0xff] %vm1421, %v1407
    %1426 = vst.msk [vmem:[%s11 + $0x20] sm:$0xff] %vm1421, %v1410
    %1427 = vst.msk [vmem:[%s11 + $0x28] sm:$0xff] %vm1421, %v1413
    %1428 = vst.msk [vmem:[%s11 + $0x30] sm:$0xff] %vm1421, %v1416
    %1429 = vst.msk [vmem:[%s11 + $0x38] sm:$0xff] %vm1421, %v1419
    // Predicated region
    $region58: #{tpu_custom_call.1} parent=1 // pred_check
      _
    $region59: #{tpu_custom_call.1} parent=1 // pred_check_branch
      %1431 = sbr.rel (0) target = $region61
    $region60: #{tpu_custom_call.1} parent=1 // pred_region
      _
    $region61: #{tpu_custom_call.1} parent=1 // pred_fallthru
      _
    // Predicated region
    $region62: #{tpu_custom_call.1} parent=1 // pred_check
      _
    $region63: #{tpu_custom_call.1} parent=1 // pred_check_branch
      %1433 = sbr.rel (0) target = $region65
    $region64: #{tpu_custom_call.1} parent=1 // pred_region
      %1435 = vsyncadd [#allocation6], 0
      %s1436 = sshll.u32 [#allocation10], 4
      %s1437 = int_to_ptr.vmem [resolvable:$true] %s1436
      %s1438 = sshll.u32 %s12, 4
      %s1439 = int_to_ptr.hbm [resolvable:$true] %s1438
      %1444 = dma.vmem_to_hbm [thread:$0]  %s1437, 256, %s1439, [#allocation6], 128, 128, 8
    $region65: #{tpu_custom_call.1} parent=1 // pred_fallthru
      _
    // Predicated region
    $region66: #{tpu_custom_call.1} parent=1 // pred_check
      _
    $region67: #{tpu_custom_call.1} parent=1 // pred_check_branch
      %1446 = sbr.rel (0) target = $region69
    $region68: #{tpu_custom_call.1} parent=1 // pred_region
      %1448 = vsyncadd [#allocation12], 0
      %s1449 = sshll.u32 [#allocation11], 4
      %s1450 = int_to_ptr.vmem [resolvable:$true] %s1449
      %s1451 = sshll.u32 %s13, 4
      %s1452 = int_to_ptr.hbm [resolvable:$true] %s1451
      %1457 = dma.vmem_to_hbm [thread:$0]  %s1450, 256, %s1452, [#allocation12], 128, 128, 8
    $region69: #{tpu_custom_call.1} parent=1 // pred_fallthru
      _
    // Predicated region
    $region70: #{tpu_custom_call.1} parent=1 // pred_check
      _
    $region71: #{tpu_custom_call.1} parent=1 // pred_check_branch
      %1459 = sbr.rel (0) target = $region73
    $region72: #{tpu_custom_call.1} parent=1 // pred_region
      _
    $region73: #{tpu_custom_call.1} parent=1 // pred_fallthru
      _
    // Predicated region
    $region74: #{tpu_custom_call.1} parent=1 // pred_check
      _
    $region75: #{tpu_custom_call.1} parent=1 // pred_check_branch
      %1461 = sbr.rel (0) target = $region77
    $region76: #{tpu_custom_call.1} parent=1 // pred_region
      %1463 = dma.done [#allocation6], 256
    $region77: #{tpu_custom_call.1} parent=1 // pred_fallthru
      _
    // Predicated region
    $region78: #{tpu_custom_call.1} parent=1 // pred_check
      _
    $region79: #{tpu_custom_call.1} parent=1 // pred_check_branch
      %1465 = sbr.rel (0) target = $region81
    $region80: #{tpu_custom_call.1} parent=1 // pred_region
      %1467 = dma.done [#allocation12], 256
    $region81: #{tpu_custom_call.1} parent=1 // pred_fallthru
      _
    %1468 = vsyncpa [#allocation5], 1
    %1469 = vsyncpa [#allocation8], 1
    %1470 = vsyncpa [#allocation6], 1
    %1471 = vsyncpa [#allocation12], 1

</llo_original>
